<compile_context>
chip_gen: v5e
topology: v5e:2x2
jax: 0.10.0
libtpu: 0.0.40
codegen_flags: <defaults>
</compile_context>

<pallas_src>
import jax
import jax.numpy as jnp
from jax.experimental import pallas as pl
from jax.experimental.pallas import tpu as pltpu

INPUT_SIZE = 64
OUTPUT_SIZE = 16
HIDDEN = (512, 256, 512, 128)

K_PAD = 128     # pad input features 64 -> 128 (lane-aligned MXU contraction dim)
OUT_PAD = 128   # pad output features 16 -> 128 (lane-dense output stores)


def dnn_kernel(x_ref,
               w1_ref, b1_ref,
               w2_ref, b2_ref,
               w3_ref, b3_ref,
               w4_ref, b4_ref,
               w5_ref, b5_ref,
               o_ref):
    """Fused 5-layer MLP on one batch tile: Linear+Sigmoid, then 4x Linear+ReLU.

    Matmul inputs are bf16, accumulation is f32, elementwise math stays f32.
    All weights/biases are resident (un-pipelined) in VMEM.
    """
    # layer1: Linear(64 -> 512), K zero-padded to 128, + Sigmoid
    h = jnp.dot(x_ref[...], w1_ref[...], preferred_element_type=jnp.float32)
    h = jax.nn.sigmoid(h + b1_ref[...])

    # layer2: Linear(512 -> 256) + ReLU
    h = jnp.dot(h.astype(jnp.bfloat16), w2_ref[...],
                preferred_element_type=jnp.float32)
    h = jnp.maximum(h + b2_ref[...], 0.0)

    # layer3: Linear(256 -> 512) + ReLU
    h = jnp.dot(h.astype(jnp.bfloat16), w3_ref[...],
                preferred_element_type=jnp.float32)
    h = jnp.maximum(h + b3_ref[...], 0.0)

    # layer4: Linear(512 -> 128) + ReLU
    h = jnp.dot(h.astype(jnp.bfloat16), w4_ref[...],
                preferred_element_type=jnp.float32)
    h = jnp.maximum(h + b4_ref[...], 0.0)

    # layer5: Linear(128 -> 16), N zero-padded to 128, + ReLU
    h = jnp.dot(h.astype(jnp.bfloat16), w5_ref[...],
                preferred_element_type=jnp.float32)
    h = jnp.maximum(h + b5_ref[...], 0.0)

    o_ref[...] = h.astype(o_ref.dtype)


def _round_up(x, m):
    return (x + m - 1) // m * m


def prepare_params(params):
    """Pad + cast params for the kernel.

    params: list of 5 (W[in, out] f32, b[1, out] f32).
    Returns flat [w1, b1, ..., w5, b5] with W in bf16 (w1 K-padded, w5 N-padded)
    and biases in f32 (added after the f32 accumulation; b5 N-padded with zeros).
    """
    (w1, b1), (w2, b2), (w3, b3), (w4, b4), (w5, b5) = params
    w1 = jnp.pad(w1, ((0, K_PAD - w1.shape[0]), (0, 0)))
    w5 = jnp.pad(w5, ((0, 0), (0, OUT_PAD - w5.shape[1])))
    b5 = jnp.pad(b5, ((0, 0), (0, OUT_PAD - b5.shape[1])))
    ws = [w.astype(jnp.bfloat16) for w in (w1, w2, w3, w4, w5)]
    bs = [b.astype(jnp.float32) for b in (b1, b2, b3, b4, b5)]
    flat = []
    for w, b in zip(ws, bs):
        flat.extend([w, b])
    return flat


def dnn_forward(x, params, *, batch_tile=512):
    """x: [B, INPUT_SIZE] float32. params: list of (W[in,out], b[1,out]) f32."""
    B, in_size = x.shape
    assert in_size == INPUT_SIZE

    flat = prepare_params(params)

    # Batch tiling: tile rounded to a sublane multiple; pad B up to a whole
    # number of tiles (zero rows are harmless and sliced off at the end).
    # For production batch sizes the default 512 gives a multi-tile grid, which
    # also lets v7x shard the "parallel" axis across its two TensorCores.
    bt = _round_up(min(batch_tile, _round_up(B, 8)), 8)
    b_pad = _round_up(B, bt)
    grid = b_pad // bt

    x_p = jnp.zeros((b_pad, K_PAD), jnp.bfloat16)
    x_p = x_p.at[:B, :in_size].set(x.astype(jnp.bfloat16))

    dims = [K_PAD, *HIDDEN, OUT_PAD]
    flops = 2 * b_pad * sum(a * b for a, b in zip(dims[:-1], dims[1:]))
    bytes_accessed = (
        x_p.size * 2                      # bf16 input
        + b_pad * OUT_PAD * 4             # f32 output
        + sum(int(a.size) * a.dtype.itemsize for a in flat))
    cost = pl.CostEstimate(flops=flops,
                           transcendentals=b_pad * HIDDEN[0],
                           bytes_accessed=bytes_accessed)

    in_specs = [pl.BlockSpec((bt, K_PAD), lambda i: (i, 0))]
    for _ in range(5):
        # Whole weight / bias resident in VMEM once; no per-step double-buffering.
        in_specs.append(pl.BlockSpec(memory_space=pltpu.MemorySpace.VMEM))
        in_specs.append(pl.BlockSpec(memory_space=pltpu.MemorySpace.VMEM))

    out = pl.pallas_call(
        dnn_kernel,
        out_shape=jax.ShapeDtypeStruct((b_pad, OUT_PAD), jnp.float32),
        grid_spec=pltpu.PrefetchScalarGridSpec(
            num_scalar_prefetch=0,
            grid=(grid,),
            in_specs=in_specs,
            out_specs=pl.BlockSpec((bt, OUT_PAD), lambda i: (i, 0)),
        ),
        compiler_params=pltpu.CompilerParams(
            dimension_semantics=("parallel",),
            vmem_limit_bytes=32 * 1024 * 1024,
        ),
        cost_estimate=cost,
    )(x_p, *flat)

    return out[:B, :OUTPUT_SIZE]


def init_params(key, input_size, output_size):
    """Deterministic init mimicking PyTorch Linear default U[-1/sqrt(fan_in), 1/sqrt(fan_in)]."""
    dims = [input_size, *HIDDEN, output_size]
    params = []
    for li in range(5):
        fan_in, fan_out = dims[li], dims[li + 1]
        key, kw, kb = jax.random.split(key, 3)
        bound = 1.0 / jnp.sqrt(jnp.float32(fan_in))
        w = jax.random.uniform(kw, (fan_in, fan_out), jnp.float32, -bound, bound)
        b = jax.random.uniform(kb, (1, fan_out), jnp.float32, -bound, bound)
        params.append((w, b))
    return params


def dnn_reference(x, params):
    h = x
    w, b = params[0]
    h = jax.nn.sigmoid(h @ w + b)
    for w, b in params[1:]:
        h = jnp.maximum(h @ w + b, 0.0)
    return h


if __name__ == "__main__":
    key = jax.random.PRNGKey(0)
    kx, kp = jax.random.split(key)

    B = 64
    x = jax.random.normal(kx, (B, INPUT_SIZE), jnp.float32)
    params = init_params(kp, INPUT_SIZE, OUTPUT_SIZE)

    out = dnn_forward(x, params)
    out = jax.block_until_ready(out)

    ref = dnn_reference(x, params)
    assert out.shape == (B, OUTPUT_SIZE)
    # bf16 matmul inputs -> looser tolerance than the pure-f32 version.
    assert jnp.allclose(out, ref, atol=5e-2, rtol=5e-2), "mismatch vs reference"

    print("KERNEL_OK")
</pallas_src>

<mosaic_0001>
module attributes {stable_mosaic.version = 11 : i64} {
  func.func @dnn_kernel(%arg0: i32, %arg1: memref<64x128xbf16, #tpu.memory_space<vmem>>, %arg2: memref<128x512xbf16, #tpu.memory_space<vmem>>, %arg3: memref<1x512xf32, #tpu.memory_space<vmem>>, %arg4: memref<512x256xbf16, #tpu.memory_space<vmem>>, %arg5: memref<1x256xf32, #tpu.memory_space<vmem>>, %arg6: memref<256x512xbf16, #tpu.memory_space<vmem>>, %arg7: memref<1x512xf32, #tpu.memory_space<vmem>>, %arg8: memref<512x128xbf16, #tpu.memory_space<vmem>>, %arg9: memref<1x128xf32, #tpu.memory_space<vmem>>, %arg10: memref<128x128xbf16, #tpu.memory_space<vmem>>, %arg11: memref<1x128xf32, #tpu.memory_space<vmem>>, %arg12: memref<64x128xf32, #tpu.memory_space<vmem>>) attributes {dimension_semantics = [#tpu.dimension_semantics<parallel>], iteration_bounds = array<i64: 1>, scalar_prefetch = 0 : i64, scratch_operands = 0 : i64, tpu.core_type = #tpu.core_type<tc>, window_params = [{transform_indices = @transform_0, window_bounds = array<i64: 64, 128>}, {pipeline_mode = #tpu.pipeline_mode<synchronous>, transform_indices = @transform_1, window_bounds = array<i64: 128, 512>}, {pipeline_mode = #tpu.pipeline_mode<synchronous>, transform_indices = @transform_2, window_bounds = array<i64: 1, 512>}, {pipeline_mode = #tpu.pipeline_mode<synchronous>, transform_indices = @transform_3, window_bounds = array<i64: 512, 256>}, {pipeline_mode = #tpu.pipeline_mode<synchronous>, transform_indices = @transform_4, window_bounds = array<i64: 1, 256>}, {pipeline_mode = #tpu.pipeline_mode<synchronous>, transform_indices = @transform_5, window_bounds = array<i64: 256, 512>}, {pipeline_mode = #tpu.pipeline_mode<synchronous>, transform_indices = @transform_6, window_bounds = array<i64: 1, 512>}, {pipeline_mode = #tpu.pipeline_mode<synchronous>, transform_indices = @transform_7, window_bounds = array<i64: 512, 128>}, {pipeline_mode = #tpu.pipeline_mode<synchronous>, transform_indices = @transform_8, window_bounds = array<i64: 1, 128>}, {pipeline_mode = #tpu.pipeline_mode<synchronous>, transform_indices = @transform_9, window_bounds = array<i64: 128, 128>}, {pipeline_mode = #tpu.pipeline_mode<synchronous>, transform_indices = @transform_10, window_bounds = array<i64: 1, 128>}, {transform_indices = @transform_11, window_bounds = array<i64: 64, 128>}]} {
    %c0 = arith.constant 0 : index
    %c0_0 = arith.constant 0 : index
    %0 = vector.load %arg1[%c0, %c0_0] : memref<64x128xbf16, #tpu.memory_space<vmem>>, vector<64x128xbf16>
    %c0_1 = arith.constant 0 : index
    %c0_2 = arith.constant 0 : index
    %1 = vector.load %arg2[%c0_1, %c0_2] : memref<128x512xbf16, #tpu.memory_space<vmem>>, vector<128x512xbf16>
    %cst = arith.constant dense<0.000000e+00> : vector<64x512xf32>
    %2 = tpu.matmul %0, %1, %cst {dimension_numbers = #tpu.dot_dimension_numbers<[1], [0], [0], [1], [0, 0, 1, 1], [], []>} : vector<64x128xbf16>, vector<128x512xbf16>, vector<64x512xf32> -> vector<64x512xf32>
    %c0_3 = arith.constant 0 : index
    %c0_4 = arith.constant 0 : index
    %3 = vector.load %arg3[%c0_3, %c0_4] : memref<1x512xf32, #tpu.memory_space<vmem>>, vector<1x512xf32>
    %4 = vector.broadcast %3 : vector<1x512xf32> to vector<64x512xf32>
    %5 = arith.addf %2, %4 : vector<64x512xf32>
    %6 = arith.negf %5 : vector<64x512xf32>
    %7 = math.exp %6 : vector<64x512xf32>
    %cst_5 = arith.constant 1.000000e+00 : f32
    %8 = vector.broadcast %cst_5 : f32 to vector<64x512xf32>
    %9 = arith.addf %8, %7 : vector<64x512xf32>
    %10 = arith.divf %8, %9 : vector<64x512xf32>
    %11 = arith.truncf %10 : vector<64x512xf32> to vector<64x512xbf16>
    %c0_6 = arith.constant 0 : index
    %c0_7 = arith.constant 0 : index
    %12 = vector.load %arg4[%c0_6, %c0_7] : memref<512x256xbf16, #tpu.memory_space<vmem>>, vector<512x256xbf16>
    %cst_8 = arith.constant dense<0.000000e+00> : vector<64x256xf32>
    %13 = tpu.matmul %11, %12, %cst_8 {dimension_numbers = #tpu.dot_dimension_numbers<[1], [0], [0], [1], [0, 0, 1, 1], [], []>} : vector<64x512xbf16>, vector<512x256xbf16>, vector<64x256xf32> -> vector<64x256xf32>
    %c0_9 = arith.constant 0 : index
    %c0_10 = arith.constant 0 : index
    %14 = vector.load %arg5[%c0_9, %c0_10] : memref<1x256xf32, #tpu.memory_space<vmem>>, vector<1x256xf32>
    %15 = vector.broadcast %14 : vector<1x256xf32> to vector<64x256xf32>
    %16 = arith.addf %13, %15 : vector<64x256xf32>
    %cst_11 = arith.constant 0.000000e+00 : f32
    %17 = vector.broadcast %cst_11 : f32 to vector<64x256xf32>
    %18 = arith.maximumf %16, %17 : vector<64x256xf32>
    %19 = arith.truncf %18 : vector<64x256xf32> to vector<64x256xbf16>
    %c0_12 = arith.constant 0 : index
    %c0_13 = arith.constant 0 : index
    %20 = vector.load %arg6[%c0_12, %c0_13] : memref<256x512xbf16, #tpu.memory_space<vmem>>, vector<256x512xbf16>
    %cst_14 = arith.constant dense<0.000000e+00> : vector<64x512xf32>
    %21 = tpu.matmul %19, %20, %cst_14 {dimension_numbers = #tpu.dot_dimension_numbers<[1], [0], [0], [1], [0, 0, 1, 1], [], []>} : vector<64x256xbf16>, vector<256x512xbf16>, vector<64x512xf32> -> vector<64x512xf32>
    %c0_15 = arith.constant 0 : index
    %c0_16 = arith.constant 0 : index
    %22 = vector.load %arg7[%c0_15, %c0_16] : memref<1x512xf32, #tpu.memory_space<vmem>>, vector<1x512xf32>
    %23 = vector.broadcast %22 : vector<1x512xf32> to vector<64x512xf32>
    %24 = arith.addf %21, %23 : vector<64x512xf32>
    %cst_17 = arith.constant 0.000000e+00 : f32
    %25 = vector.broadcast %cst_17 : f32 to vector<64x512xf32>
    %26 = arith.maximumf %24, %25 : vector<64x512xf32>
    %27 = arith.truncf %26 : vector<64x512xf32> to vector<64x512xbf16>
    %c0_18 = arith.constant 0 : index
    %c0_19 = arith.constant 0 : index
    %28 = vector.load %arg8[%c0_18, %c0_19] : memref<512x128xbf16, #tpu.memory_space<vmem>>, vector<512x128xbf16>
    %cst_20 = arith.constant dense<0.000000e+00> : vector<64x128xf32>
    %29 = tpu.matmul %27, %28, %cst_20 {dimension_numbers = #tpu.dot_dimension_numbers<[1], [0], [0], [1], [0, 0, 1, 1], [], []>} : vector<64x512xbf16>, vector<512x128xbf16>, vector<64x128xf32> -> vector<64x128xf32>
    %c0_21 = arith.constant 0 : index
    %c0_22 = arith.constant 0 : index
    %30 = vector.load %arg9[%c0_21, %c0_22] : memref<1x128xf32, #tpu.memory_space<vmem>>, vector<1x128xf32>
    %31 = vector.broadcast %30 : vector<1x128xf32> to vector<64x128xf32>
    %32 = arith.addf %29, %31 : vector<64x128xf32>
    %cst_23 = arith.constant 0.000000e+00 : f32
    %33 = vector.broadcast %cst_23 : f32 to vector<64x128xf32>
    %34 = arith.maximumf %32, %33 : vector<64x128xf32>
    %35 = arith.truncf %34 : vector<64x128xf32> to vector<64x128xbf16>
    %c0_24 = arith.constant 0 : index
    %c0_25 = arith.constant 0 : index
    %36 = vector.load %arg10[%c0_24, %c0_25] : memref<128x128xbf16, #tpu.memory_space<vmem>>, vector<128x128xbf16>
    %cst_26 = arith.constant dense<0.000000e+00> : vector<64x128xf32>
    %37 = tpu.matmul %35, %36, %cst_26 {dimension_numbers = #tpu.dot_dimension_numbers<[1], [0], [0], [1], [0, 0, 1, 1], [], []>} : vector<64x128xbf16>, vector<128x128xbf16>, vector<64x128xf32> -> vector<64x128xf32>
    %c0_27 = arith.constant 0 : index
    %c0_28 = arith.constant 0 : index
    %38 = vector.load %arg11[%c0_27, %c0_28] : memref<1x128xf32, #tpu.memory_space<vmem>>, vector<1x128xf32>
    %39 = vector.broadcast %38 : vector<1x128xf32> to vector<64x128xf32>
    %40 = arith.addf %37, %39 : vector<64x128xf32>
    %cst_29 = arith.constant 0.000000e+00 : f32
    %41 = vector.broadcast %cst_29 : f32 to vector<64x128xf32>
    %42 = arith.maximumf %40, %41 : vector<64x128xf32>
    %c0_30 = arith.constant 0 : index
    %c0_31 = arith.constant 0 : index
    %43 = vector.load %arg12[%c0_30, %c0_31] : memref<64x128xf32, #tpu.memory_space<vmem>>, vector<64x128xf32>
    tpu.vector_store %arg12[%c0_30, %c0_31], %42 {strides = array<i32>} : memref<64x128xf32, #tpu.memory_space<vmem>>, vector<64x128xf32>,
    return
  }
  func.func @transform_0(%arg0: i32) -> (i32, i32) {
    %c0_i32 = arith.constant 0 : i32
    %c0_i32_0 = arith.constant 0 : i32
    return %arg0, %c0_i32 : i32, i32
  }
  func.func @transform_1(%arg0: i32) -> (i32, i32) {
    %c0_i32 = arith.constant 0 : i32
    %c0_i32_0 = arith.constant 0 : i32
    %c0_i32_1 = arith.constant 0 : i32
    return %c0_i32, %c0_i32_0 : i32, i32
  }
  func.func @transform_2(%arg0: i32) -> (i32, i32) {
    %c0_i32 = arith.constant 0 : i32
    %c0_i32_0 = arith.constant 0 : i32
    %c0_i32_1 = arith.constant 0 : i32
    return %c0_i32, %c0_i32_0 : i32, i32
  }
  func.func @transform_3(%arg0: i32) -> (i32, i32) {
    %c0_i32 = arith.constant 0 : i32
    %c0_i32_0 = arith.constant 0 : i32
    %c0_i32_1 = arith.constant 0 : i32
    return %c0_i32, %c0_i32_0 : i32, i32
  }
  func.func @transform_4(%arg0: i32) -> (i32, i32) {
    %c0_i32 = arith.constant 0 : i32
    %c0_i32_0 = arith.constant 0 : i32
    %c0_i32_1 = arith.constant 0 : i32
    return %c0_i32, %c0_i32_0 : i32, i32
  }
  func.func @transform_5(%arg0: i32) -> (i32, i32) {
    %c0_i32 = arith.constant 0 : i32
    %c0_i32_0 = arith.constant 0 : i32
    %c0_i32_1 = arith.constant 0 : i32
    return %c0_i32, %c0_i32_0 : i32, i32
  }
  func.func @transform_6(%arg0: i32) -> (i32, i32) {
    %c0_i32 = arith.constant 0 : i32
    %c0_i32_0 = arith.constant 0 : i32
    %c0_i32_1 = arith.constant 0 : i32
    return %c0_i32, %c0_i32_0 : i32, i32
  }
  func.func @transform_7(%arg0: i32) -> (i32, i32) {
    %c0_i32 = arith.constant 0 : i32
    %c0_i32_0 = arith.constant 0 : i32
    %c0_i32_1 = arith.constant 0 : i32
    return %c0_i32, %c0_i32_0 : i32, i32
  }
  func.func @transform_8(%arg0: i32) -> (i32, i32) {
    %c0_i32 = arith.constant 0 : i32
    %c0_i32_0 = arith.constant 0 : i32
    %c0_i32_1 = arith.constant 0 : i32
    return %c0_i32, %c0_i32_0 : i32, i32
  }
  func.func @transform_9(%arg0: i32) -> (i32, i32) {
    %c0_i32 = arith.constant 0 : i32
    %c0_i32_0 = arith.constant 0 : i32
    %c0_i32_1 = arith.constant 0 : i32
    return %c0_i32, %c0_i32_0 : i32, i32
  }
  func.func @transform_10(%arg0: i32) -> (i32, i32) {
    %c0_i32 = arith.constant 0 : i32
    %c0_i32_0 = arith.constant 0 : i32
    %c0_i32_1 = arith.constant 0 : i32
    return %c0_i32, %c0_i32_0 : i32, i32
  }
  func.func @transform_11(%arg0: i32) -> (i32, i32) {
    %c0_i32 = arith.constant 0 : i32
    %c0_i32_0 = arith.constant 0 : i32
    return %arg0, %c0_i32 : i32, i32
  }
}

</mosaic_0001>

<llo_original>
// kernel: tpu_custom_call.1
$region0: #{tpu_custom_call.1}
  #allocation0 [shape = 'u32[]', space=smem, size = 0x4, offset = 0x4, fixed_abs, tag = 'smem constant byte address 0x4 - core index']
  #allocation1 [shape = 'u32[72,128]{1,0:T(1,128)}', space=vmem, size = 0x9000, scoped, tag = 'internal scratch']
  %s0 = inlined_call_operand.hbm [shape: bf16[64,128], index: 0, kind: input, shape index: {}]
  %s1 = inlined_call_operand.hbm [shape: bf16[128,512], index: 1, kind: input, shape index: {}]
  %s2 = inlined_call_operand.hbm [shape: f32[1,512], index: 2, kind: input, shape index: {}]
  %s3 = inlined_call_operand.hbm [shape: bf16[512,256], index: 3, kind: input, shape index: {}]
  %s4 = inlined_call_operand.hbm [shape: f32[1,256], index: 4, kind: input, shape index: {}]
  %s5 = inlined_call_operand.hbm [shape: bf16[256,512], index: 5, kind: input, shape index: {}]
  %s6 = inlined_call_operand.vmem [shape: f32[1,512], index: 6, kind: input, shape index: {}]
  %s7 = inlined_call_operand.hbm [shape: bf16[512,128], index: 7, kind: input, shape index: {}]
  %s8 = inlined_call_operand.vmem [shape: f32[1,128], index: 8, kind: input, shape index: {}]
  %s9 = inlined_call_operand.hbm [shape: bf16[128,128], index: 9, kind: input, shape index: {}]
  %s10 = inlined_call_operand.vmem [shape: f32[1,128], index: 10, kind: input, shape index: {}]
  %s11 = inlined_call_operand.hbm [shape: f32[64,128], index: 11, kind: output, shape index: {}]
  %s12 = sld [smem:[#allocation0]]
  $region86: #{tpu_custom_call.1} parent=0
    _
  %s14 = ssub.s32 1, %s12
  %s15 = scalar_select 0, %s14, %s12
  $region1: #{tpu_custom_call.1} parent=0
    #allocation2 [shape = 'u8[16384]{0}', space=vmem, size = 0x4000, scoped, tag = 'input window, operand 0, single buffered']
    #allocation3 [shape = 's32[1]{0}', space=sflag, size = 0x4, scoped, tag = 'scoped memory for tpu_custom_call.1']
    #allocation4 [shape = 's32[1]{0}', space=sflag, size = 0x4, scoped, tag = 'scoped memory for tpu_custom_call.1']
    #allocation5 [shape = 'u8[131072]{0}', space=vmem, size = 0x20000, scoped, tag = 'input window, operand 1, single buffered']
    #allocation6 [shape = 's32[1]{0}', space=sflag, size = 0x4, scoped, tag = 'scoped memory for tpu_custom_call.1']
    #allocation7 [shape = 'u8[2048]{0}', space=vmem, size = 0x800, scoped, tag = 'input window, operand 2, single buffered']
    #allocation8 [shape = 'u8[262144]{0}', space=vmem, size = 0x40000, scoped, tag = 'input window, operand 3, single buffered']
    #allocation9 [shape = 's32[1]{0}', space=sflag, size = 0x4, scoped, tag = 'scoped memory for tpu_custom_call.1']
    #allocation10 [shape = 'u8[1024]{0}', space=vmem, size = 0x400, scoped, tag = 'input window, operand 4, single buffered']
    #allocation11 [shape = 'u8[262144]{0}', space=vmem, size = 0x40000, scoped, tag = 'input window, operand 5, single buffered']
    #allocation12 [shape = 's32[1]{0}', space=sflag, size = 0x4, scoped, tag = 'scoped memory for tpu_custom_call.1']
    #allocation13 [shape = 'u8[131072]{0}', space=vmem, size = 0x20000, scoped, tag = 'input window, operand 7, single buffered']
    #allocation14 [shape = 'u8[32768]{0}', space=vmem, size = 0x8000, scoped, tag = 'input window, operand 9, single buffered']
    #allocation15 [shape = 's32[1]{0}', space=sflag, size = 0x4, scoped, tag = 'scoped memory for tpu_custom_call.1']
    #allocation16 [shape = 'u8[32768]{0}', space=vmem, size = 0x8000, scoped, tag = 'output window, operand 0, single buffered']
    %16 = vsyncpa [#allocation3], 0
    %17 = vsyncpa [#allocation6], 0
    %18 = vsyncpa [#allocation9], 0
    %19 = vsyncpa [#allocation12], 0
    %20 = vsyncpa [#allocation15], 0
    %21 = vsyncpa [#allocation4], 0
    // Predicated region
    $region2: #{tpu_custom_call.1} parent=1 // pred_check
      _
    $region3: #{tpu_custom_call.1} parent=1 // pred_check_branch
      %23 = sbr.rel (0) target = $region5
    $region4: #{tpu_custom_call.1} parent=1 // pred_region
      %25 = vsyncadd [#allocation3], 0
      %s26 = sshll.u32 %s0, 4
      %s27 = int_to_ptr.hbm [resolvable:$true] %s26
      %s28 = sshll.u32 [#allocation2], 4
      %s29 = int_to_ptr.vmem [resolvable:$true] %s28
      %34 = dma.hbm_to_vmem [thread:$0]  %s27, 512, %s29, [#allocation3], 64, 64, 4
    $region5: #{tpu_custom_call.1} parent=1 // pred_fallthru
      _
    // Predicated region
    $region6: #{tpu_custom_call.1} parent=1 // pred_check
      _
    $region7: #{tpu_custom_call.1} parent=1 // pred_check_branch
      %36 = sbr.rel (0) target = $region9
    $region8: #{tpu_custom_call.1} parent=1 // pred_region
      %38 = vsyncadd [#allocation6], 0
      %s39 = sshll.u32 %s1, 4
      %s40 = int_to_ptr.hbm [resolvable:$true] %s39
      %s41 = sshll.u32 [#allocation5], 4
      %s42 = int_to_ptr.vmem [resolvable:$true] %s41
      %47 = dma.hbm_to_vmem [thread:$0]  %s40, 4096, %s42, [#allocation6], 256, 256, 16
    $region9: #{tpu_custom_call.1} parent=1 // pred_fallthru
      _
    // Predicated region
    $region10: #{tpu_custom_call.1} parent=1 // pred_check
      _
    $region11: #{tpu_custom_call.1} parent=1 // pred_check_branch
      %49 = sbr.rel (0) target = $region13
    $region12: #{tpu_custom_call.1} parent=1 // pred_region
      %51 = vsyncadd [#allocation6], 0
      %s53 = sshll.u32 %s2, 4
      %s54 = int_to_ptr.hbm [resolvable:$true] %s53
      %s55 = sshll.u32 [#allocation7], 4
      %s56 = int_to_ptr.vmem [resolvable:$true] %s55
      %58 = dma.hbm_to_vmem [thread:$0]  %s54, 64, %s56, [#allocation6]
    $region13: #{tpu_custom_call.1} parent=1 // pred_fallthru
      _
    // Predicated region
    $region14: #{tpu_custom_call.1} parent=1 // pred_check
      _
    $region15: #{tpu_custom_call.1} parent=1 // pred_check_branch
      %60 = sbr.rel (0) target = $region17
    $region16: #{tpu_custom_call.1} parent=1 // pred_region
      %62 = vsyncadd [#allocation9], 0
      %s63 = sshll.u32 %s3, 4
      %s64 = int_to_ptr.hbm [resolvable:$true] %s63
      %s65 = sshll.u32 [#allocation8], 4
      %s66 = int_to_ptr.vmem [resolvable:$true] %s65
      %71 = dma.hbm_to_vmem [thread:$0]  %s64, 8192, %s66, [#allocation9], 128, 128, 8
    $region17: #{tpu_custom_call.1} parent=1 // pred_fallthru
      _
    // Predicated region
    $region18: #{tpu_custom_call.1} parent=1 // pred_check
      _
    $region19: #{tpu_custom_call.1} parent=1 // pred_check_branch
      %73 = sbr.rel (0) target = $region21
    $region20: #{tpu_custom_call.1} parent=1 // pred_region
      %75 = vsyncadd [#allocation9], 0
      %s77 = sshll.u32 %s4, 4
      %s78 = int_to_ptr.hbm [resolvable:$true] %s77
      %s79 = sshll.u32 [#allocation10], 4
      %s80 = int_to_ptr.vmem [resolvable:$true] %s79
      %82 = dma.hbm_to_vmem [thread:$0]  %s78, 32, %s80, [#allocation9]
    $region21: #{tpu_custom_call.1} parent=1 // pred_fallthru
      _
    // Predicated region
    $region22: #{tpu_custom_call.1} parent=1 // pred_check
      _
    $region23: #{tpu_custom_call.1} parent=1 // pred_check_branch
      %84 = sbr.rel (0) target = $region25
    $region24: #{tpu_custom_call.1} parent=1 // pred_region
      %86 = vsyncadd [#allocation12], 0
      %s87 = sshll.u32 %s5, 4
      %s88 = int_to_ptr.hbm [resolvable:$true] %s87
      %s89 = sshll.u32 [#allocation11], 4
      %s90 = int_to_ptr.vmem [resolvable:$true] %s89
      %95 = dma.hbm_to_vmem [thread:$0]  %s88, 8192, %s90, [#allocation12], 256, 256, 16
    $region25: #{tpu_custom_call.1} parent=1 // pred_fallthru
      _
    // Predicated region
    $region26: #{tpu_custom_call.1} parent=1 // pred_check
      _
    $region27: #{tpu_custom_call.1} parent=1 // pred_check_branch
      %97 = sbr.rel (0) target = $region29
    $region28: #{tpu_custom_call.1} parent=1 // pred_region
      _
    $region29: #{tpu_custom_call.1} parent=1 // pred_fallthru
      _
    // Predicated region
    $region30: #{tpu_custom_call.1} parent=1 // pred_check
      _
    $region31: #{tpu_custom_call.1} parent=1 // pred_check_branch
      %99 = sbr.rel (0) target = $region33
    $region32: #{tpu_custom_call.1} parent=1 // pred_region
      %101 = vsyncadd [#allocation12], 0
      %s102 = sshll.u32 %s7, 4
      %s103 = int_to_ptr.hbm [resolvable:$true] %s102
      %s104 = sshll.u32 [#allocation13], 4
      %s105 = int_to_ptr.vmem [resolvable:$true] %s104
      %110 = dma.hbm_to_vmem [thread:$0]  %s103, 4096, %s105, [#allocation12], 64, 64, 4
    $region33: #{tpu_custom_call.1} parent=1 // pred_fallthru
      _
    // Predicated region
    $region34: #{tpu_custom_call.1} parent=1 // pred_check
      _
    $region35: #{tpu_custom_call.1} parent=1 // pred_check_branch
      %112 = sbr.rel (0) target = $region37
    $region36: #{tpu_custom_call.1} parent=1 // pred_region
      _
    $region37: #{tpu_custom_call.1} parent=1 // pred_fallthru
      _
    // Predicated region
    $region38: #{tpu_custom_call.1} parent=1 // pred_check
      _
    $region39: #{tpu_custom_call.1} parent=1 // pred_check_branch
      %114 = sbr.rel (0) target = $region41
    $region40: #{tpu_custom_call.1} parent=1 // pred_region
      %116 = vsyncadd [#allocation15], 0
      %s117 = sshll.u32 %s9, 4
      %s118 = int_to_ptr.hbm [resolvable:$true] %s117
      %s119 = sshll.u32 [#allocation14], 4
      %s120 = int_to_ptr.vmem [resolvable:$true] %s119
      %125 = dma.hbm_to_vmem [thread:$0]  %s118, 1024, %s120, [#allocation15], 64, 64, 4
    $region41: #{tpu_custom_call.1} parent=1 // pred_fallthru
      _
    // Predicated region
    $region42: #{tpu_custom_call.1} parent=1 // pred_check
      _
    $region43: #{tpu_custom_call.1} parent=1 // pred_check_branch
      %127 = sbr.rel (0) target = $region45
    $region44: #{tpu_custom_call.1} parent=1 // pred_region
      _
    $region45: #{tpu_custom_call.1} parent=1 // pred_fallthru
      _
    // Predicated region
    $region46: #{tpu_custom_call.1} parent=1 // pred_check
      _
    $region47: #{tpu_custom_call.1} parent=1 // pred_check_branch
      %129 = sbr.rel (0) target = $region49
    $region48: #{tpu_custom_call.1} parent=1 // pred_region
      %131 = dma.done [#allocation3], 512
    $region49: #{tpu_custom_call.1} parent=1 // pred_fallthru
      _
    // Predicated region
    $region50: #{tpu_custom_call.1} parent=1 // pred_check
      _
    $region51: #{tpu_custom_call.1} parent=1 // pred_check_branch
      %133 = sbr.rel (0) target = $region53
    $region52: #{tpu_custom_call.1} parent=1 // pred_region
      %135 = dma.done [#allocation6], 4096
    $region53: #{tpu_custom_call.1} parent=1 // pred_fallthru
      _
    // Predicated region
    $region54: #{tpu_custom_call.1} parent=1 // pred_check
      _
    $region55: #{tpu_custom_call.1} parent=1 // pred_check_branch
      %137 = sbr.rel (0) target = $region57
    $region56: #{tpu_custom_call.1} parent=1 // pred_region
      %139 = dma.done [#allocation6], 64
    $region57: #{tpu_custom_call.1} parent=1 // pred_fallthru
      _
    // Predicated region
    $region58: #{tpu_custom_call.1} parent=1 // pred_check
      _
    $region59: #{tpu_custom_call.1} parent=1 // pred_check_branch
      %141 = sbr.rel (0) target = $region61
    $region60: #{tpu_custom_call.1} parent=1 // pred_region
      %143 = dma.done [#allocation9], 8192
    $region61: #{tpu_custom_call.1} parent=1 // pred_fallthru
      _
    // Predicated region
    $region62: #{tpu_custom_call.1} parent=1 // pred_check
      _
    $region63: #{tpu_custom_call.1} parent=1 // pred_check_branch
      %145 = sbr.rel (0) target = $region65
    $region64: #{tpu_custom_call.1} parent=1 // pred_region
      %147 = dma.done [#allocation9], 32
    $region65: #{tpu_custom_call.1} parent=1 // pred_fallthru
      _
    // Predicated region
    $region66: #{tpu_custom_call.1} parent=1 // pred_check
      _
    $region67: #{tpu_custom_call.1} parent=1 // pred_check_branch
      %149 = sbr.rel (0) target = $region69
    $region68: #{tpu_custom_call.1} parent=1 // pred_region
      %151 = dma.done [#allocation12], 8192
    $region69: #{tpu_custom_call.1} parent=1 // pred_fallthru
      _
    // Predicated region
    $region70: #{tpu_custom_call.1} parent=1 // pred_check
      _
    $region71: #{tpu_custom_call.1} parent=1 // pred_check_branch
      %153 = sbr.rel (0) target = $region73
    $region72: #{tpu_custom_call.1} parent=1 // pred_region
      %155 = dma.done [#allocation12], 4096
    $region73: #{tpu_custom_call.1} parent=1 // pred_fallthru
      _
    // Predicated region
    $region74: #{tpu_custom_call.1} parent=1 // pred_check
      _
    $region75: #{tpu_custom_call.1} parent=1 // pred_check_branch
      %157 = sbr.rel (0) target = $region77
    $region76: #{tpu_custom_call.1} parent=1 // pred_region
      %159 = dma.done [#allocation15], 1024
    $region77: #{tpu_custom_call.1} parent=1 // pred_fallthru
      _
    %v160 = vld [vmem:[#allocation2] sm:$0xf]
    %v161 = vld [vmem:[#allocation2 + $0x4] sm:$0xf]
    %v162 = vld [vmem:[#allocation2 + $0x8] sm:$0xf]
    %v163 = vld [vmem:[#allocation2 + $0xc] sm:$0xf]
    %v164 = vld [vmem:[#allocation2 + $0x10] sm:$0xf]
    %v165 = vld [vmem:[#allocation2 + $0x14] sm:$0xf]
    %v166 = vld [vmem:[#allocation2 + $0x18] sm:$0xf]
    %v167 = vld [vmem:[#allocation2 + $0x1c] sm:$0xf]
    %v168 = vld [vmem:[#allocation5] sm:$0xff]
    %v169 = vld [vmem:[#allocation5 + $0x8] sm:$0xff]
    %v170 = vld [vmem:[#allocation5 + $0x10] sm:$0xff]
    %v171 = vld [vmem:[#allocation5 + $0x18] sm:$0xff]
    %v172 = vld [vmem:[#allocation5 + $0x20] sm:$0xff]
    %v173 = vld [vmem:[#allocation5 + $0x28] sm:$0xff]
    %v174 = vld [vmem:[#allocation5 + $0x30] sm:$0xff]
    %v175 = vld [vmem:[#allocation5 + $0x38] sm:$0xff]
    %v176 = vld [vmem:[#allocation5 + $0x40] sm:$0xff]
    %v177 = vld [vmem:[#allocation5 + $0x48] sm:$0xff]
    %v178 = vld [vmem:[#allocation5 + $0x50] sm:$0xff]
    %v179 = vld [vmem:[#allocation5 + $0x58] sm:$0xff]
    %v180 = vld [vmem:[#allocation5 + $0x60] sm:$0xff]
    %v181 = vld [vmem:[#allocation5 + $0x68] sm:$0xff]
    %v182 = vld [vmem:[#allocation5 + $0x70] sm:$0xff]
    %v183 = vld [vmem:[#allocation5 + $0x78] sm:$0xff]
    %v184 = vld [vmem:[#allocation5 + $0x80] sm:$0xff]
    %v185 = vld [vmem:[#allocation5 + $0x88] sm:$0xff]
    %v186 = vld [vmem:[#allocation5 + $0x90] sm:$0xff]
    %v187 = vld [vmem:[#allocation5 + $0x98] sm:$0xff]
    %v188 = vld [vmem:[#allocation5 + $0xa0] sm:$0xff]
    %v189 = vld [vmem:[#allocation5 + $0xa8] sm:$0xff]
    %v190 = vld [vmem:[#allocation5 + $0xb0] sm:$0xff]
    %v191 = vld [vmem:[#allocation5 + $0xb8] sm:$0xff]
    %v192 = vld [vmem:[#allocation5 + $0xc0] sm:$0xff]
    %v193 = vld [vmem:[#allocation5 + $0xc8] sm:$0xff]
    %v194 = vld [vmem:[#allocation5 + $0xd0] sm:$0xff]
    %v195 = vld [vmem:[#allocation5 + $0xd8] sm:$0xff]
    %v196 = vld [vmem:[#allocation5 + $0xe0] sm:$0xff]
    %v197 = vld [vmem:[#allocation5 + $0xe8] sm:$0xff]
    %v198 = vld [vmem:[#allocation5 + $0xf0] sm:$0xff]
    %v199 = vld [vmem:[#allocation5 + $0xf8] sm:$0xff]
    %v200 = vld [vmem:[#allocation7] sm:$0xf]
    %v202 = vperm.slane %v200, 0
    %v203 = vperm.slane %v200, 1
    %v204 = vperm.slane %v200, 2
    %v205 = vperm.slane %v200, 3
    %v218 = vunpack.c.l.b16 %v160
    %v219 = vunpack.c.l.b16 %v161
    %v220 = vunpack.c.l.b16 %v162
    %v221 = vunpack.c.l.b16 %v163
    %v222 = vunpack.c.l.b16 %v164
    %v223 = vunpack.c.l.b16 %v165
    %v224 = vunpack.c.l.b16 %v166
    %v225 = vunpack.c.l.b16 %v167
    %v226 = vpack.c.b16 %v219, %v218
    %v227 = vpack.c.b16 %v221, %v220
    %v228 = vpack.c.b16 %v223, %v222
    %v229 = vpack.c.b16 %v225, %v224
    %v266 = vunpack.c.l.b16 %v168
    %v267 = vunpack.c.h.b16 %v168
    %v268 = vunpack.c.l.b16 %v169
    %v269 = vunpack.c.h.b16 %v169
    %v270 = vunpack.c.l.b16 %v170
    %v271 = vunpack.c.h.b16 %v170
    %v272 = vunpack.c.l.b16 %v171
    %v273 = vunpack.c.h.b16 %v171
    %v274 = vunpack.c.l.b16 %v172
    %v275 = vunpack.c.h.b16 %v172
    %v276 = vunpack.c.l.b16 %v173
    %v277 = vunpack.c.h.b16 %v173
    %v278 = vunpack.c.l.b16 %v174
    %v279 = vunpack.c.h.b16 %v174
    %v280 = vunpack.c.l.b16 %v175
    %v281 = vunpack.c.h.b16 %v175
    %v282 = vunpack.c.l.b16 %v176
    %v283 = vunpack.c.h.b16 %v176
    %v284 = vunpack.c.l.b16 %v177
    %v285 = vunpack.c.h.b16 %v177
    %v286 = vunpack.c.l.b16 %v178
    %v287 = vunpack.c.h.b16 %v178
    %v288 = vunpack.c.l.b16 %v179
    %v289 = vunpack.c.h.b16 %v179
    %v290 = vunpack.c.l.b16 %v180
    %v291 = vunpack.c.h.b16 %v180
    %v292 = vunpack.c.l.b16 %v181
    %v293 = vunpack.c.h.b16 %v181
    %v294 = vunpack.c.l.b16 %v182
    %v295 = vunpack.c.h.b16 %v182
    %v296 = vunpack.c.l.b16 %v183
    %v297 = vunpack.c.h.b16 %v183
    %v298 = vunpack.c.l.b16 %v184
    %v299 = vunpack.c.h.b16 %v184
    %v300 = vunpack.c.l.b16 %v185
    %v301 = vunpack.c.h.b16 %v185
    %v302 = vunpack.c.l.b16 %v186
    %v303 = vunpack.c.h.b16 %v186
    %v304 = vunpack.c.l.b16 %v187
    %v305 = vunpack.c.h.b16 %v187
    %v306 = vunpack.c.l.b16 %v188
    %v307 = vunpack.c.h.b16 %v188
    %v308 = vunpack.c.l.b16 %v189
    %v309 = vunpack.c.h.b16 %v189
    %v310 = vunpack.c.l.b16 %v190
    %v311 = vunpack.c.h.b16 %v190
    %v312 = vunpack.c.l.b16 %v191
    %v313 = vunpack.c.h.b16 %v191
    %v314 = vunpack.c.l.b16 %v192
    %v315 = vunpack.c.h.b16 %v192
    %v316 = vunpack.c.l.b16 %v193
    %v317 = vunpack.c.h.b16 %v193
    %v318 = vunpack.c.l.b16 %v194
    %v319 = vunpack.c.h.b16 %v194
    %v320 = vunpack.c.l.b16 %v195
    %v321 = vunpack.c.h.b16 %v195
    %v322 = vunpack.c.l.b16 %v196
    %v323 = vunpack.c.h.b16 %v196
    %v324 = vunpack.c.l.b16 %v197
    %v325 = vunpack.c.h.b16 %v197
    %v326 = vunpack.c.l.b16 %v198
    %v327 = vunpack.c.h.b16 %v198
    %v328 = vunpack.c.l.b16 %v199
    %v329 = vunpack.c.h.b16 %v199
    %v330 = vpack.c.b16 %v270, %v266
    %v331 = vpack.c.b16 %v271, %v267
    %v332 = vpack.c.b16 %v272, %v268
    %v333 = vpack.c.b16 %v273, %v269
    %v334 = vpack.c.b16 %v278, %v274
    %v335 = vpack.c.b16 %v279, %v275
    %v336 = vpack.c.b16 %v280, %v276
    %v337 = vpack.c.b16 %v281, %v277
    %v338 = vpack.c.b16 %v286, %v282
    %v339 = vpack.c.b16 %v287, %v283
    %v340 = vpack.c.b16 %v288, %v284
    %v341 = vpack.c.b16 %v289, %v285
    %v342 = vpack.c.b16 %v294, %v290
    %v343 = vpack.c.b16 %v295, %v291
    %v344 = vpack.c.b16 %v296, %v292
    %v345 = vpack.c.b16 %v297, %v293
    %v346 = vpack.c.b16 %v302, %v298
    %v347 = vpack.c.b16 %v303, %v299
    %v348 = vpack.c.b16 %v304, %v300
    %v349 = vpack.c.b16 %v305, %v301
    %v350 = vpack.c.b16 %v310, %v306
    %v351 = vpack.c.b16 %v311, %v307
    %v352 = vpack.c.b16 %v312, %v308
    %v353 = vpack.c.b16 %v313, %v309
    %v354 = vpack.c.b16 %v318, %v314
    %v355 = vpack.c.b16 %v319, %v315
    %v356 = vpack.c.b16 %v320, %v316
    %v357 = vpack.c.b16 %v321, %v317
    %v358 = vpack.c.b16 %v326, %v322
    %v359 = vpack.c.b16 %v327, %v323
    %v360 = vpack.c.b16 %v328, %v324
    %v361 = vpack.c.b16 %v329, %v325
    %394 = vmatpush.bf16.msra.mxu0 %v358
    %395 = vmatpush.bf16.msra.mxu0 %v354
    %396 = vmatpush.bf16.msra.mxu0 %v350
    %397 = vmatpush.bf16.msra.mxu0 %v346
    %398 = vmatpush.bf16.msra.mxu0 %v342
    %399 = vmatpush.bf16.msra.mxu0 %v338
    %400 = vmatpush.bf16.msra.mxu0 %v334
    %401 = vmatpush.bf16.msra.mxu0 %v330
    %402 = vmatmul.bf16.gmra.mxu0 %v226
    %v403 = vpop.f32.mrf.mxu0
    %v404 = vadd.f32 %v202, %v403
    %v405 = vpop.f32.mrf.mxu0
    %v406 = vadd.f32 %v202, %v405
    %407 = vmatmul.bf16.gmra.mxu0 %v227
    %v408 = vpop.f32.mrf.mxu0
    %v409 = vadd.f32 %v202, %v408
    %v410 = vpop.f32.mrf.mxu0
    %v411 = vadd.f32 %v202, %v410
    %412 = vmatmul.bf16.gmra.mxu0 %v228
    %v413 = vpop.f32.mrf.mxu0
    %v414 = vadd.f32 %v202, %v413
    %v415 = vpop.f32.mrf.mxu0
    %v416 = vadd.f32 %v202, %v415
    %417 = vmatmul.bf16.gmra.mxu0 %v229
    %v418 = vpop.f32.mrf.mxu0
    %v419 = vadd.f32 %v202, %v418
    %v420 = vpop.f32.mrf.mxu0
    %v421 = vadd.f32 %v202, %v420
    %422 = vdwg.mxu0
    %423 = vmatpush.bf16.msra.mxu0 %v359
    %424 = vmatpush.bf16.msra.mxu0 %v355
    %425 = vmatpush.bf16.msra.mxu0 %v351
    %426 = vmatpush.bf16.msra.mxu0 %v347
    %427 = vmatpush.bf16.msra.mxu0 %v343
    %428 = vmatpush.bf16.msra.mxu0 %v339
    %429 = vmatpush.bf16.msra.mxu0 %v335
    %430 = vmatpush.bf16.msra.mxu0 %v331
    %431 = vmatmul.bf16.gmra.mxu0 %v226
    %v432 = vpop.f32.mrf.mxu0
    %v433 = vadd.f32 %v203, %v432
    %v434 = vpop.f32.mrf.mxu0
    %v435 = vadd.f32 %v203, %v434
    %436 = vmatmul.bf16.gmra.mxu0 %v227
    %v437 = vpop.f32.mrf.mxu0
    %v438 = vadd.f32 %v203, %v437
    %v439 = vpop.f32.mrf.mxu0
    %v440 = vadd.f32 %v203, %v439
    %441 = vmatmul.bf16.gmra.mxu0 %v228
    %v442 = vpop.f32.mrf.mxu0
    %v443 = vadd.f32 %v203, %v442
    %v444 = vpop.f32.mrf.mxu0
    %v445 = vadd.f32 %v203, %v444
    %446 = vmatmul.bf16.gmra.mxu0 %v229
    %v447 = vpop.f32.mrf.mxu0
    %v448 = vadd.f32 %v203, %v447
    %v449 = vpop.f32.mrf.mxu0
    %v450 = vadd.f32 %v203, %v449
    %451 = vdwg.mxu0
    %452 = vmatpush.bf16.msra.mxu0 %v360
    %453 = vmatpush.bf16.msra.mxu0 %v356
    %454 = vmatpush.bf16.msra.mxu0 %v352
    %455 = vmatpush.bf16.msra.mxu0 %v348
    %456 = vmatpush.bf16.msra.mxu0 %v344
    %457 = vmatpush.bf16.msra.mxu0 %v340
    %458 = vmatpush.bf16.msra.mxu0 %v336
    %459 = vmatpush.bf16.msra.mxu0 %v332
    %460 = vmatmul.bf16.gmra.mxu0 %v226
    %v461 = vpop.f32.mrf.mxu0
    %v462 = vadd.f32 %v204, %v461
    %v463 = vpop.f32.mrf.mxu0
    %v464 = vadd.f32 %v204, %v463
    %465 = vmatmul.bf16.gmra.mxu0 %v227
    %v466 = vpop.f32.mrf.mxu0
    %v467 = vadd.f32 %v204, %v466
    %v468 = vpop.f32.mrf.mxu0
    %v469 = vadd.f32 %v204, %v468
    %470 = vmatmul.bf16.gmra.mxu0 %v228
    %v471 = vpop.f32.mrf.mxu0
    %v472 = vadd.f32 %v204, %v471
    %v473 = vpop.f32.mrf.mxu0
    %v474 = vadd.f32 %v204, %v473
    %475 = vmatmul.bf16.gmra.mxu0 %v229
    %v476 = vpop.f32.mrf.mxu0
    %v477 = vadd.f32 %v204, %v476
    %v478 = vpop.f32.mrf.mxu0
    %v479 = vadd.f32 %v204, %v478
    %480 = vdwg.mxu0
    %481 = vmatpush.bf16.msra.mxu0 %v361
    %482 = vmatpush.bf16.msra.mxu0 %v357
    %483 = vmatpush.bf16.msra.mxu0 %v353
    %484 = vmatpush.bf16.msra.mxu0 %v349
    %485 = vmatpush.bf16.msra.mxu0 %v345
    %486 = vmatpush.bf16.msra.mxu0 %v341
    %487 = vmatpush.bf16.msra.mxu0 %v337
    %488 = vmatpush.bf16.msra.mxu0 %v333
    %489 = vmatmul.bf16.gmra.mxu0 %v226
    %v490 = vpop.f32.mrf.mxu0
    %v491 = vadd.f32 %v205, %v490
    %v492 = vpop.f32.mrf.mxu0
    %v493 = vadd.f32 %v205, %v492
    %494 = vmatmul.bf16.gmra.mxu0 %v227
    %v495 = vpop.f32.mrf.mxu0
    %v496 = vadd.f32 %v205, %v495
    %v497 = vpop.f32.mrf.mxu0
    %v498 = vadd.f32 %v205, %v497
    %499 = vmatmul.bf16.gmra.mxu0 %v228
    %v500 = vpop.f32.mrf.mxu0
    %v501 = vadd.f32 %v205, %v500
    %v502 = vpop.f32.mrf.mxu0
    %v503 = vadd.f32 %v205, %v502
    %504 = vmatmul.bf16.gmra.mxu0 %v229
    %v505 = vpop.f32.mrf.mxu0
    %v506 = vadd.f32 %v205, %v505
    %v507 = vpop.f32.mrf.mxu0
    %v508 = vadd.f32 %v205, %v507
    %509 = vdwg.mxu0
    %v510 = vxor.u32 %v404, 2147483648
    %v511 = vxor.u32 %v433, 2147483648
    %v512 = vxor.u32 %v462, 2147483648
    %v513 = vxor.u32 %v491, 2147483648
    %v514 = vxor.u32 %v406, 2147483648
    %v515 = vxor.u32 %v435, 2147483648
    %v516 = vxor.u32 %v464, 2147483648
    %v517 = vxor.u32 %v493, 2147483648
    %v518 = vxor.u32 %v409, 2147483648
    %v519 = vxor.u32 %v438, 2147483648
    %v520 = vxor.u32 %v467, 2147483648
    %v521 = vxor.u32 %v496, 2147483648
    %v522 = vxor.u32 %v411, 2147483648
    %v523 = vxor.u32 %v440, 2147483648
    %v524 = vxor.u32 %v469, 2147483648
    %v525 = vxor.u32 %v498, 2147483648
    %v526 = vxor.u32 %v414, 2147483648
    %v527 = vxor.u32 %v443, 2147483648
    %v528 = vxor.u32 %v472, 2147483648
    %v529 = vxor.u32 %v501, 2147483648
    %v530 = vxor.u32 %v416, 2147483648
    %v531 = vxor.u32 %v445, 2147483648
    %v532 = vxor.u32 %v474, 2147483648
    %v533 = vxor.u32 %v503, 2147483648
    %v534 = vxor.u32 %v419, 2147483648
    %v535 = vxor.u32 %v448, 2147483648
    %v536 = vxor.u32 %v477, 2147483648
    %v537 = vxor.u32 %v506, 2147483648
    %v538 = vxor.u32 %v421, 2147483648
    %v539 = vxor.u32 %v450, 2147483648
    %v540 = vxor.u32 %v479, 2147483648
    %v541 = vxor.u32 %v508, 2147483648
    %v542 = vmul.f32 %v510, 1.442695
    %v543 = vpow.pop %v542
    %v544 = vmul.f32 %v511, 1.442695
    %v545 = vpow.pop %v544
    %v546 = vmul.f32 %v512, 1.442695
    %v547 = vpow.pop %v546
    %v548 = vmul.f32 %v513, 1.442695
    %v549 = vpow.pop %v548
    %v550 = vmul.f32 %v514, 1.442695
    %v551 = vpow.pop %v550
    %v552 = vmul.f32 %v515, 1.442695
    %v553 = vpow.pop %v552
    %v554 = vmul.f32 %v516, 1.442695
    %v555 = vpow.pop %v554
    %v556 = vmul.f32 %v517, 1.442695
    %v557 = vpow.pop %v556
    %v558 = vmul.f32 %v518, 1.442695
    %v559 = vpow.pop %v558
    %v560 = vmul.f32 %v519, 1.442695
    %v561 = vpow.pop %v560
    %v562 = vmul.f32 %v520, 1.442695
    %v563 = vpow.pop %v562
    %v564 = vmul.f32 %v521, 1.442695
    %v565 = vpow.pop %v564
    %v566 = vmul.f32 %v522, 1.442695
    %v567 = vpow.pop %v566
    %v568 = vmul.f32 %v523, 1.442695
    %v569 = vpow.pop %v568
    %v570 = vmul.f32 %v524, 1.442695
    %v571 = vpow.pop %v570
    %v572 = vmul.f32 %v525, 1.442695
    %v573 = vpow.pop %v572
    %v574 = vmul.f32 %v526, 1.442695
    %v575 = vpow.pop %v574
    %v576 = vmul.f32 %v527, 1.442695
    %v577 = vpow.pop %v576
    %v578 = vmul.f32 %v528, 1.442695
    %v579 = vpow.pop %v578
    %v580 = vmul.f32 %v529, 1.442695
    %v581 = vpow.pop %v580
    %v582 = vmul.f32 %v530, 1.442695
    %v583 = vpow.pop %v582
    %v584 = vmul.f32 %v531, 1.442695
    %v585 = vpow.pop %v584
    %v586 = vmul.f32 %v532, 1.442695
    %v587 = vpow.pop %v586
    %v588 = vmul.f32 %v533, 1.442695
    %v589 = vpow.pop %v588
    %v590 = vmul.f32 %v534, 1.442695
    %v591 = vpow.pop %v590
    %v592 = vmul.f32 %v535, 1.442695
    %v593 = vpow.pop %v592
    %v594 = vmul.f32 %v536, 1.442695
    %v595 = vpow.pop %v594
    %v596 = vmul.f32 %v537, 1.442695
    %v597 = vpow.pop %v596
    %v598 = vmul.f32 %v538, 1.442695
    %v599 = vpow.pop %v598
    %v600 = vmul.f32 %v539, 1.442695
    %v601 = vpow.pop %v600
    %v602 = vmul.f32 %v540, 1.442695
    %v603 = vpow.pop %v602
    %v604 = vmul.f32 %v541, 1.442695
    %v605 = vpow.pop %v604
    %v606 = vadd.f32 %v543, 1.0
    %v607 = vadd.f32 %v545, 1.0
    %v608 = vadd.f32 %v547, 1.0
    %v609 = vadd.f32 %v549, 1.0
    %v610 = vadd.f32 %v551, 1.0
    %v611 = vadd.f32 %v553, 1.0
    %v612 = vadd.f32 %v555, 1.0
    %v613 = vadd.f32 %v557, 1.0
    %v614 = vadd.f32 %v559, 1.0
    %v615 = vadd.f32 %v561, 1.0
    %v616 = vadd.f32 %v563, 1.0
    %v617 = vadd.f32 %v565, 1.0
    %v618 = vadd.f32 %v567, 1.0
    %v619 = vadd.f32 %v569, 1.0
    %v620 = vadd.f32 %v571, 1.0
    %v621 = vadd.f32 %v573, 1.0
    %v622 = vadd.f32 %v575, 1.0
    %v623 = vadd.f32 %v577, 1.0
    %v624 = vadd.f32 %v579, 1.0
    %v625 = vadd.f32 %v581, 1.0
    %v626 = vadd.f32 %v583, 1.0
    %v627 = vadd.f32 %v585, 1.0
    %v628 = vadd.f32 %v587, 1.0
    %v629 = vadd.f32 %v589, 1.0
    %v630 = vadd.f32 %v591, 1.0
    %v631 = vadd.f32 %v593, 1.0
    %v632 = vadd.f32 %v595, 1.0
    %v633 = vadd.f32 %v597, 1.0
    %v634 = vadd.f32 %v599, 1.0
    %v635 = vadd.f32 %v601, 1.0
    %v636 = vadd.f32 %v603, 1.0
    %v637 = vadd.f32 %v605, 1.0
    %v638 = vrcp.pop %v606
    %v639 = vmul.f32 %v606, %v638
    %v640 = vsub.f32 1.0, %v639
    %v641 = vmul.f32 %v638, %v640
    %v642 = vadd.f32 %v638, %v641
    %vm643 = vweird.f32 %v606
    %vm644 = vweird.f32 %v638
    %vm645 = vmor %vm643, %vm644
    %v646 = vsel %vm645, %v638, %v642
    %v647 = vand.u32 2147483647, %v606
    %vm648 = vcmp.eq.f32.partialorder %v647, 8.507059e+37
    %v649 = vand.u32 %v606, 2147483648
    %v650 = vor.u32 1.1754944e-38, %v649
    %v651 = vsel %vm648, %v650, %v646
    %v652 = vmul.f32 1.0, %v651
    %v653 = vrcp.pop %v607
    %v654 = vmul.f32 %v607, %v653
    %v655 = vsub.f32 1.0, %v654
    %v656 = vmul.f32 %v653, %v655
    %v657 = vadd.f32 %v653, %v656
    %vm658 = vweird.f32 %v607
    %vm659 = vweird.f32 %v653
    %vm660 = vmor %vm658, %vm659
    %v661 = vsel %vm660, %v653, %v657
    %v662 = vand.u32 2147483647, %v607
    %vm663 = vcmp.eq.f32.partialorder %v662, 8.507059e+37
    %v664 = vand.u32 %v607, 2147483648
    %v665 = vor.u32 1.1754944e-38, %v664
    %v666 = vsel %vm663, %v665, %v661
    %v667 = vmul.f32 1.0, %v666
    %v668 = vrcp.pop %v608
    %v669 = vmul.f32 %v608, %v668
    %v670 = vsub.f32 1.0, %v669
    %v671 = vmul.f32 %v668, %v670
    %v672 = vadd.f32 %v668, %v671
    %vm673 = vweird.f32 %v608
    %vm674 = vweird.f32 %v668
    %vm675 = vmor %vm673, %vm674
    %v676 = vsel %vm675, %v668, %v672
    %v677 = vand.u32 2147483647, %v608
    %vm678 = vcmp.eq.f32.partialorder %v677, 8.507059e+37
    %v679 = vand.u32 %v608, 2147483648
    %v680 = vor.u32 1.1754944e-38, %v679
    %v681 = vsel %vm678, %v680, %v676
    %v682 = vmul.f32 1.0, %v681
    %v683 = vrcp.pop %v609
    %v684 = vmul.f32 %v609, %v683
    %v685 = vsub.f32 1.0, %v684
    %v686 = vmul.f32 %v683, %v685
    %v687 = vadd.f32 %v683, %v686
    %vm688 = vweird.f32 %v609
    %vm689 = vweird.f32 %v683
    %vm690 = vmor %vm688, %vm689
    %v691 = vsel %vm690, %v683, %v687
    %v692 = vand.u32 2147483647, %v609
    %vm693 = vcmp.eq.f32.partialorder %v692, 8.507059e+37
    %v694 = vand.u32 %v609, 2147483648
    %v695 = vor.u32 1.1754944e-38, %v694
    %v696 = vsel %vm693, %v695, %v691
    %v697 = vmul.f32 1.0, %v696
    %v698 = vrcp.pop %v610
    %v699 = vmul.f32 %v610, %v698
    %v700 = vsub.f32 1.0, %v699
    %v701 = vmul.f32 %v698, %v700
    %v702 = vadd.f32 %v698, %v701
    %vm703 = vweird.f32 %v610
    %vm704 = vweird.f32 %v698
    %vm705 = vmor %vm703, %vm704
    %v706 = vsel %vm705, %v698, %v702
    %v707 = vand.u32 2147483647, %v610
    %vm708 = vcmp.eq.f32.partialorder %v707, 8.507059e+37
    %v709 = vand.u32 %v610, 2147483648
    %v710 = vor.u32 1.1754944e-38, %v709
    %v711 = vsel %vm708, %v710, %v706
    %v712 = vmul.f32 1.0, %v711
    %v713 = vrcp.pop %v611
    %v714 = vmul.f32 %v611, %v713
    %v715 = vsub.f32 1.0, %v714
    %v716 = vmul.f32 %v713, %v715
    %v717 = vadd.f32 %v713, %v716
    %vm718 = vweird.f32 %v611
    %vm719 = vweird.f32 %v713
    %vm720 = vmor %vm718, %vm719
    %v721 = vsel %vm720, %v713, %v717
    %v722 = vand.u32 2147483647, %v611
    %vm723 = vcmp.eq.f32.partialorder %v722, 8.507059e+37
    %v724 = vand.u32 %v611, 2147483648
    %v725 = vor.u32 1.1754944e-38, %v724
    %v726 = vsel %vm723, %v725, %v721
    %v727 = vmul.f32 1.0, %v726
    %v728 = vrcp.pop %v612
    %v729 = vmul.f32 %v612, %v728
    %v730 = vsub.f32 1.0, %v729
    %v731 = vmul.f32 %v728, %v730
    %v732 = vadd.f32 %v728, %v731
    %vm733 = vweird.f32 %v612
    %vm734 = vweird.f32 %v728
    %vm735 = vmor %vm733, %vm734
    %v736 = vsel %vm735, %v728, %v732
    %v737 = vand.u32 2147483647, %v612
    %vm738 = vcmp.eq.f32.partialorder %v737, 8.507059e+37
    %v739 = vand.u32 %v612, 2147483648
    %v740 = vor.u32 1.1754944e-38, %v739
    %v741 = vsel %vm738, %v740, %v736
    %v742 = vmul.f32 1.0, %v741
    %v743 = vrcp.pop %v613
    %v744 = vmul.f32 %v613, %v743
    %v745 = vsub.f32 1.0, %v744
    %v746 = vmul.f32 %v743, %v745
    %v747 = vadd.f32 %v743, %v746
    %vm748 = vweird.f32 %v613
    %vm749 = vweird.f32 %v743
    %vm750 = vmor %vm748, %vm749
    %v751 = vsel %vm750, %v743, %v747
    %v752 = vand.u32 2147483647, %v613
    %vm753 = vcmp.eq.f32.partialorder %v752, 8.507059e+37
    %v754 = vand.u32 %v613, 2147483648
    %v755 = vor.u32 1.1754944e-38, %v754
    %v756 = vsel %vm753, %v755, %v751
    %v757 = vmul.f32 1.0, %v756
    %v758 = vrcp.pop %v614
    %v759 = vmul.f32 %v614, %v758
    %v760 = vsub.f32 1.0, %v759
    %v761 = vmul.f32 %v758, %v760
    %v762 = vadd.f32 %v758, %v761
    %vm763 = vweird.f32 %v614
    %vm764 = vweird.f32 %v758
    %vm765 = vmor %vm763, %vm764
    %v766 = vsel %vm765, %v758, %v762
    %v767 = vand.u32 2147483647, %v614
    %vm768 = vcmp.eq.f32.partialorder %v767, 8.507059e+37
    %v769 = vand.u32 %v614, 2147483648
    %v770 = vor.u32 1.1754944e-38, %v769
    %v771 = vsel %vm768, %v770, %v766
    %v772 = vmul.f32 1.0, %v771
    %v773 = vrcp.pop %v615
    %v774 = vmul.f32 %v615, %v773
    %v775 = vsub.f32 1.0, %v774
    %v776 = vmul.f32 %v773, %v775
    %v777 = vadd.f32 %v773, %v776
    %vm778 = vweird.f32 %v615
    %vm779 = vweird.f32 %v773
    %vm780 = vmor %vm778, %vm779
    %v781 = vsel %vm780, %v773, %v777
    %v782 = vand.u32 2147483647, %v615
    %vm783 = vcmp.eq.f32.partialorder %v782, 8.507059e+37
    %v784 = vand.u32 %v615, 2147483648
    %v785 = vor.u32 1.1754944e-38, %v784
    %v786 = vsel %vm783, %v785, %v781
    %v787 = vmul.f32 1.0, %v786
    %v788 = vrcp.pop %v616
    %v789 = vmul.f32 %v616, %v788
    %v790 = vsub.f32 1.0, %v789
    %v791 = vmul.f32 %v788, %v790
    %v792 = vadd.f32 %v788, %v791
    %vm793 = vweird.f32 %v616
    %vm794 = vweird.f32 %v788
    %vm795 = vmor %vm793, %vm794
    %v796 = vsel %vm795, %v788, %v792
    %v797 = vand.u32 2147483647, %v616
    %vm798 = vcmp.eq.f32.partialorder %v797, 8.507059e+37
    %v799 = vand.u32 %v616, 2147483648
    %v800 = vor.u32 1.1754944e-38, %v799
    %v801 = vsel %vm798, %v800, %v796
    %v802 = vmul.f32 1.0, %v801
    %v803 = vrcp.pop %v617
    %v804 = vmul.f32 %v617, %v803
    %v805 = vsub.f32 1.0, %v804
    %v806 = vmul.f32 %v803, %v805
    %v807 = vadd.f32 %v803, %v806
    %vm808 = vweird.f32 %v617
    %vm809 = vweird.f32 %v803
    %vm810 = vmor %vm808, %vm809
    %v811 = vsel %vm810, %v803, %v807
    %v812 = vand.u32 2147483647, %v617
    %vm813 = vcmp.eq.f32.partialorder %v812, 8.507059e+37
    %v814 = vand.u32 %v617, 2147483648
    %v815 = vor.u32 1.1754944e-38, %v814
    %v816 = vsel %vm813, %v815, %v811
    %v817 = vmul.f32 1.0, %v816
    %v818 = vrcp.pop %v618
    %v819 = vmul.f32 %v618, %v818
    %v820 = vsub.f32 1.0, %v819
    %v821 = vmul.f32 %v818, %v820
    %v822 = vadd.f32 %v818, %v821
    %vm823 = vweird.f32 %v618
    %vm824 = vweird.f32 %v818
    %vm825 = vmor %vm823, %vm824
    %v826 = vsel %vm825, %v818, %v822
    %v827 = vand.u32 2147483647, %v618
    %vm828 = vcmp.eq.f32.partialorder %v827, 8.507059e+37
    %v829 = vand.u32 %v618, 2147483648
    %v830 = vor.u32 1.1754944e-38, %v829
    %v831 = vsel %vm828, %v830, %v826
    %v832 = vmul.f32 1.0, %v831
    %v833 = vrcp.pop %v619
    %v834 = vmul.f32 %v619, %v833
    %v835 = vsub.f32 1.0, %v834
    %v836 = vmul.f32 %v833, %v835
    %v837 = vadd.f32 %v833, %v836
    %vm838 = vweird.f32 %v619
    %vm839 = vweird.f32 %v833
    %vm840 = vmor %vm838, %vm839
    %v841 = vsel %vm840, %v833, %v837
    %v842 = vand.u32 2147483647, %v619
    %vm843 = vcmp.eq.f32.partialorder %v842, 8.507059e+37
    %v844 = vand.u32 %v619, 2147483648
    %v845 = vor.u32 1.1754944e-38, %v844
    %v846 = vsel %vm843, %v845, %v841
    %v847 = vmul.f32 1.0, %v846
    %v848 = vrcp.pop %v620
    %v849 = vmul.f32 %v620, %v848
    %v850 = vsub.f32 1.0, %v849
    %v851 = vmul.f32 %v848, %v850
    %v852 = vadd.f32 %v848, %v851
    %vm853 = vweird.f32 %v620
    %vm854 = vweird.f32 %v848
    %vm855 = vmor %vm853, %vm854
    %v856 = vsel %vm855, %v848, %v852
    %v857 = vand.u32 2147483647, %v620
    %vm858 = vcmp.eq.f32.partialorder %v857, 8.507059e+37
    %v859 = vand.u32 %v620, 2147483648
    %v860 = vor.u32 1.1754944e-38, %v859
    %v861 = vsel %vm858, %v860, %v856
    %v862 = vmul.f32 1.0, %v861
    %v863 = vrcp.pop %v621
    %v864 = vmul.f32 %v621, %v863
    %v865 = vsub.f32 1.0, %v864
    %v866 = vmul.f32 %v863, %v865
    %v867 = vadd.f32 %v863, %v866
    %vm868 = vweird.f32 %v621
    %vm869 = vweird.f32 %v863
    %vm870 = vmor %vm868, %vm869
    %v871 = vsel %vm870, %v863, %v867
    %v872 = vand.u32 2147483647, %v621
    %vm873 = vcmp.eq.f32.partialorder %v872, 8.507059e+37
    %v874 = vand.u32 %v621, 2147483648
    %v875 = vor.u32 1.1754944e-38, %v874
    %v876 = vsel %vm873, %v875, %v871
    %v877 = vmul.f32 1.0, %v876
    %v878 = vrcp.pop %v622
    %v879 = vmul.f32 %v622, %v878
    %v880 = vsub.f32 1.0, %v879
    %v881 = vmul.f32 %v878, %v880
    %v882 = vadd.f32 %v878, %v881
    %vm883 = vweird.f32 %v622
    %vm884 = vweird.f32 %v878
    %vm885 = vmor %vm883, %vm884
    %v886 = vsel %vm885, %v878, %v882
    %v887 = vand.u32 2147483647, %v622
    %vm888 = vcmp.eq.f32.partialorder %v887, 8.507059e+37
    %v889 = vand.u32 %v622, 2147483648
    %v890 = vor.u32 1.1754944e-38, %v889
    %v891 = vsel %vm888, %v890, %v886
    %v892 = vmul.f32 1.0, %v891
    %v893 = vrcp.pop %v623
    %v894 = vmul.f32 %v623, %v893
    %v895 = vsub.f32 1.0, %v894
    %v896 = vmul.f32 %v893, %v895
    %v897 = vadd.f32 %v893, %v896
    %vm898 = vweird.f32 %v623
    %vm899 = vweird.f32 %v893
    %vm900 = vmor %vm898, %vm899
    %v901 = vsel %vm900, %v893, %v897
    %v902 = vand.u32 2147483647, %v623
    %vm903 = vcmp.eq.f32.partialorder %v902, 8.507059e+37
    %v904 = vand.u32 %v623, 2147483648
    %v905 = vor.u32 1.1754944e-38, %v904
    %v906 = vsel %vm903, %v905, %v901
    %v907 = vmul.f32 1.0, %v906
    %v908 = vrcp.pop %v624
    %v909 = vmul.f32 %v624, %v908
    %v910 = vsub.f32 1.0, %v909
    %v911 = vmul.f32 %v908, %v910
    %v912 = vadd.f32 %v908, %v911
    %vm913 = vweird.f32 %v624
    %vm914 = vweird.f32 %v908
    %vm915 = vmor %vm913, %vm914
    %v916 = vsel %vm915, %v908, %v912
    %v917 = vand.u32 2147483647, %v624
    %vm918 = vcmp.eq.f32.partialorder %v917, 8.507059e+37
    %v919 = vand.u32 %v624, 2147483648
    %v920 = vor.u32 1.1754944e-38, %v919
    %v921 = vsel %vm918, %v920, %v916
    %v922 = vmul.f32 1.0, %v921
    %v923 = vrcp.pop %v625
    %v924 = vmul.f32 %v625, %v923
    %v925 = vsub.f32 1.0, %v924
    %v926 = vmul.f32 %v923, %v925
    %v927 = vadd.f32 %v923, %v926
    %vm928 = vweird.f32 %v625
    %vm929 = vweird.f32 %v923
    %vm930 = vmor %vm928, %vm929
    %v931 = vsel %vm930, %v923, %v927
    %v932 = vand.u32 2147483647, %v625
    %vm933 = vcmp.eq.f32.partialorder %v932, 8.507059e+37
    %v934 = vand.u32 %v625, 2147483648
    %v935 = vor.u32 1.1754944e-38, %v934
    %v936 = vsel %vm933, %v935, %v931
    %v937 = vmul.f32 1.0, %v936
    %v938 = vrcp.pop %v626
    %v939 = vmul.f32 %v626, %v938
    %v940 = vsub.f32 1.0, %v939
    %v941 = vmul.f32 %v938, %v940
    %v942 = vadd.f32 %v938, %v941
    %vm943 = vweird.f32 %v626
    %vm944 = vweird.f32 %v938
    %vm945 = vmor %vm943, %vm944
    %v946 = vsel %vm945, %v938, %v942
    %v947 = vand.u32 2147483647, %v626
    %vm948 = vcmp.eq.f32.partialorder %v947, 8.507059e+37
    %v949 = vand.u32 %v626, 2147483648
    %v950 = vor.u32 1.1754944e-38, %v949
    %v951 = vsel %vm948, %v950, %v946
    %v952 = vmul.f32 1.0, %v951
    %v953 = vrcp.pop %v627
    %v954 = vmul.f32 %v627, %v953
    %v955 = vsub.f32 1.0, %v954
    %v956 = vmul.f32 %v953, %v955
    %v957 = vadd.f32 %v953, %v956
    %vm958 = vweird.f32 %v627
    %vm959 = vweird.f32 %v953
    %vm960 = vmor %vm958, %vm959
    %v961 = vsel %vm960, %v953, %v957
    %v962 = vand.u32 2147483647, %v627
    %vm963 = vcmp.eq.f32.partialorder %v962, 8.507059e+37
    %v964 = vand.u32 %v627, 2147483648
    %v965 = vor.u32 1.1754944e-38, %v964
    %v966 = vsel %vm963, %v965, %v961
    %v967 = vmul.f32 1.0, %v966
    %v968 = vrcp.pop %v628
    %v969 = vmul.f32 %v628, %v968
    %v970 = vsub.f32 1.0, %v969
    %v971 = vmul.f32 %v968, %v970
    %v972 = vadd.f32 %v968, %v971
    %vm973 = vweird.f32 %v628
    %vm974 = vweird.f32 %v968
    %vm975 = vmor %vm973, %vm974
    %v976 = vsel %vm975, %v968, %v972
    %v977 = vand.u32 2147483647, %v628
    %vm978 = vcmp.eq.f32.partialorder %v977, 8.507059e+37
    %v979 = vand.u32 %v628, 2147483648
    %v980 = vor.u32 1.1754944e-38, %v979
    %v981 = vsel %vm978, %v980, %v976
    %v982 = vmul.f32 1.0, %v981
    %v983 = vrcp.pop %v629
    %v984 = vmul.f32 %v629, %v983
    %v985 = vsub.f32 1.0, %v984
    %v986 = vmul.f32 %v983, %v985
    %v987 = vadd.f32 %v983, %v986
    %vm988 = vweird.f32 %v629
    %vm989 = vweird.f32 %v983
    %vm990 = vmor %vm988, %vm989
    %v991 = vsel %vm990, %v983, %v987
    %v992 = vand.u32 2147483647, %v629
    %vm993 = vcmp.eq.f32.partialorder %v992, 8.507059e+37
    %v994 = vand.u32 %v629, 2147483648
    %v995 = vor.u32 1.1754944e-38, %v994
    %v996 = vsel %vm993, %v995, %v991
    %v997 = vmul.f32 1.0, %v996
    %v998 = vrcp.pop %v630
    %v999 = vmul.f32 %v630, %v998
    %v1000 = vsub.f32 1.0, %v999
    %v1001 = vmul.f32 %v998, %v1000
    %v1002 = vadd.f32 %v998, %v1001
    %vm1003 = vweird.f32 %v630
    %vm1004 = vweird.f32 %v998
    %vm1005 = vmor %vm1003, %vm1004
    %v1006 = vsel %vm1005, %v998, %v1002
    %v1007 = vand.u32 2147483647, %v630
    %vm1008 = vcmp.eq.f32.partialorder %v1007, 8.507059e+37
    %v1009 = vand.u32 %v630, 2147483648
    %v1010 = vor.u32 1.1754944e-38, %v1009
    %v1011 = vsel %vm1008, %v1010, %v1006
    %v1012 = vmul.f32 1.0, %v1011
    %v1013 = vrcp.pop %v631
    %v1014 = vmul.f32 %v631, %v1013
    %v1015 = vsub.f32 1.0, %v1014
    %v1016 = vmul.f32 %v1013, %v1015
    %v1017 = vadd.f32 %v1013, %v1016
    %vm1018 = vweird.f32 %v631
    %vm1019 = vweird.f32 %v1013
    %vm1020 = vmor %vm1018, %vm1019
    %v1021 = vsel %vm1020, %v1013, %v1017
    %v1022 = vand.u32 2147483647, %v631
    %vm1023 = vcmp.eq.f32.partialorder %v1022, 8.507059e+37
    %v1024 = vand.u32 %v631, 2147483648
    %v1025 = vor.u32 1.1754944e-38, %v1024
    %v1026 = vsel %vm1023, %v1025, %v1021
    %v1027 = vmul.f32 1.0, %v1026
    %v1028 = vrcp.pop %v632
    %v1029 = vmul.f32 %v632, %v1028
    %v1030 = vsub.f32 1.0, %v1029
    %v1031 = vmul.f32 %v1028, %v1030
    %v1032 = vadd.f32 %v1028, %v1031
    %vm1033 = vweird.f32 %v632
    %vm1034 = vweird.f32 %v1028
    %vm1035 = vmor %vm1033, %vm1034
    %v1036 = vsel %vm1035, %v1028, %v1032
    %v1037 = vand.u32 2147483647, %v632
    %vm1038 = vcmp.eq.f32.partialorder %v1037, 8.507059e+37
    %v1039 = vand.u32 %v632, 2147483648
    %v1040 = vor.u32 1.1754944e-38, %v1039
    %v1041 = vsel %vm1038, %v1040, %v1036
    %v1042 = vmul.f32 1.0, %v1041
    %v1043 = vrcp.pop %v633
    %v1044 = vmul.f32 %v633, %v1043
    %v1045 = vsub.f32 1.0, %v1044
    %v1046 = vmul.f32 %v1043, %v1045
    %v1047 = vadd.f32 %v1043, %v1046
    %vm1048 = vweird.f32 %v633
    %vm1049 = vweird.f32 %v1043
    %vm1050 = vmor %vm1048, %vm1049
    %v1051 = vsel %vm1050, %v1043, %v1047
    %v1052 = vand.u32 2147483647, %v633
    %vm1053 = vcmp.eq.f32.partialorder %v1052, 8.507059e+37
    %v1054 = vand.u32 %v633, 2147483648
    %v1055 = vor.u32 1.1754944e-38, %v1054
    %v1056 = vsel %vm1053, %v1055, %v1051
    %v1057 = vmul.f32 1.0, %v1056
    %v1058 = vrcp.pop %v634
    %v1059 = vmul.f32 %v634, %v1058
    %v1060 = vsub.f32 1.0, %v1059
    %v1061 = vmul.f32 %v1058, %v1060
    %v1062 = vadd.f32 %v1058, %v1061
    %vm1063 = vweird.f32 %v634
    %vm1064 = vweird.f32 %v1058
    %vm1065 = vmor %vm1063, %vm1064
    %v1066 = vsel %vm1065, %v1058, %v1062
    %v1067 = vand.u32 2147483647, %v634
    %vm1068 = vcmp.eq.f32.partialorder %v1067, 8.507059e+37
    %v1069 = vand.u32 %v634, 2147483648
    %v1070 = vor.u32 1.1754944e-38, %v1069
    %v1071 = vsel %vm1068, %v1070, %v1066
    %v1072 = vmul.f32 1.0, %v1071
    %v1073 = vrcp.pop %v635
    %v1074 = vmul.f32 %v635, %v1073
    %v1075 = vsub.f32 1.0, %v1074
    %v1076 = vmul.f32 %v1073, %v1075
    %v1077 = vadd.f32 %v1073, %v1076
    %vm1078 = vweird.f32 %v635
    %vm1079 = vweird.f32 %v1073
    %vm1080 = vmor %vm1078, %vm1079
    %v1081 = vsel %vm1080, %v1073, %v1077
    %v1082 = vand.u32 2147483647, %v635
    %vm1083 = vcmp.eq.f32.partialorder %v1082, 8.507059e+37
    %v1084 = vand.u32 %v635, 2147483648
    %v1085 = vor.u32 1.1754944e-38, %v1084
    %v1086 = vsel %vm1083, %v1085, %v1081
    %v1087 = vmul.f32 1.0, %v1086
    %v1088 = vrcp.pop %v636
    %v1089 = vmul.f32 %v636, %v1088
    %v1090 = vsub.f32 1.0, %v1089
    %v1091 = vmul.f32 %v1088, %v1090
    %v1092 = vadd.f32 %v1088, %v1091
    %vm1093 = vweird.f32 %v636
    %vm1094 = vweird.f32 %v1088
    %vm1095 = vmor %vm1093, %vm1094
    %v1096 = vsel %vm1095, %v1088, %v1092
    %v1097 = vand.u32 2147483647, %v636
    %vm1098 = vcmp.eq.f32.partialorder %v1097, 8.507059e+37
    %v1099 = vand.u32 %v636, 2147483648
    %v1100 = vor.u32 1.1754944e-38, %v1099
    %v1101 = vsel %vm1098, %v1100, %v1096
    %v1102 = vmul.f32 1.0, %v1101
    %v1103 = vrcp.pop %v637
    %v1104 = vmul.f32 %v637, %v1103
    %v1105 = vsub.f32 1.0, %v1104
    %v1106 = vmul.f32 %v1103, %v1105
    %v1107 = vadd.f32 %v1103, %v1106
    %vm1108 = vweird.f32 %v637
    %vm1109 = vweird.f32 %v1103
    %vm1110 = vmor %vm1108, %vm1109
    %v1111 = vsel %vm1110, %v1103, %v1107
    %v1112 = vand.u32 2147483647, %v637
    %vm1113 = vcmp.eq.f32.partialorder %v1112, 8.507059e+37
    %v1114 = vand.u32 %v637, 2147483648
    %v1115 = vor.u32 1.1754944e-38, %v1114
    %v1116 = vsel %vm1113, %v1115, %v1111
    %v1117 = vmul.f32 1.0, %v1116
    %v1118 = vpack.c.bf16 %v712, %v652
    %v1119 = vpack.c.bf16 %v727, %v667
    %v1120 = vpack.c.bf16 %v742, %v682
    %v1121 = vpack.c.bf16 %v757, %v697
    %v1122 = vpack.c.bf16 %v832, %v772
    %v1123 = vpack.c.bf16 %v847, %v787
    %v1124 = vpack.c.bf16 %v862, %v802
    %v1125 = vpack.c.bf16 %v877, %v817
    %v1126 = vpack.c.bf16 %v952, %v892
    %v1127 = vpack.c.bf16 %v967, %v907
    %v1128 = vpack.c.bf16 %v982, %v922
    %v1129 = vpack.c.bf16 %v997, %v937
    %v1130 = vpack.c.bf16 %v1072, %v1012
    %v1131 = vpack.c.bf16 %v1087, %v1027
    %v1132 = vpack.c.bf16 %v1102, %v1042
    %v1133 = vpack.c.bf16 %v1117, %v1057
    %v1134 = vld [vmem:[#allocation8] sm:$0xff]
    %v1135 = vld [vmem:[#allocation8 + $0x8] sm:$0xff]
    %v1136 = vld [vmem:[#allocation8 + $0x10] sm:$0xff]
    %v1137 = vld [vmem:[#allocation8 + $0x18] sm:$0xff]
    %v1138 = vld [vmem:[#allocation8 + $0x20] sm:$0xff]
    %v1139 = vld [vmem:[#allocation8 + $0x28] sm:$0xff]
    %v1140 = vld [vmem:[#allocation8 + $0x30] sm:$0xff]
    %v1141 = vld [vmem:[#allocation8 + $0x38] sm:$0xff]
    %v1142 = vld [vmem:[#allocation8 + $0x40] sm:$0xff]
    %v1143 = vld [vmem:[#allocation8 + $0x48] sm:$0xff]
    %v1144 = vld [vmem:[#allocation8 + $0x50] sm:$0xff]
    %v1145 = vld [vmem:[#allocation8 + $0x58] sm:$0xff]
    %v1146 = vld [vmem:[#allocation8 + $0x60] sm:$0xff]
    %v1147 = vld [vmem:[#allocation8 + $0x68] sm:$0xff]
    %v1148 = vld [vmem:[#allocation8 + $0x70] sm:$0xff]
    %v1149 = vld [vmem:[#allocation8 + $0x78] sm:$0xff]
    %v1150 = vld [vmem:[#allocation8 + $0x80] sm:$0xff]
    %v1151 = vld [vmem:[#allocation8 + $0x88] sm:$0xff]
    %v1152 = vld [vmem:[#allocation8 + $0x90] sm:$0xff]
    %v1153 = vld [vmem:[#allocation8 + $0x98] sm:$0xff]
    %v1154 = vld [vmem:[#allocation8 + $0xa0] sm:$0xff]
    %v1155 = vld [vmem:[#allocation8 + $0xa8] sm:$0xff]
    %v1156 = vld [vmem:[#allocation8 + $0xb0] sm:$0xff]
    %v1157 = vld [vmem:[#allocation8 + $0xb8] sm:$0xff]
    %v1158 = vld [vmem:[#allocation8 + $0xc0] sm:$0xff]
    %v1159 = vld [vmem:[#allocation8 + $0xc8] sm:$0xff]
    %v1160 = vld [vmem:[#allocation8 + $0xd0] sm:$0xff]
    %v1161 = vld [vmem:[#allocation8 + $0xd8] sm:$0xff]
    %v1162 = vld [vmem:[#allocation8 + $0xe0] sm:$0xff]
    %v1163 = vld [vmem:[#allocation8 + $0xe8] sm:$0xff]
    %v1164 = vld [vmem:[#allocation8 + $0xf0] sm:$0xff]
    %v1165 = vld [vmem:[#allocation8 + $0xf8] sm:$0xff]
    %v1166 = vld [vmem:[#allocation8 + $0x100] sm:$0xff]
    %v1167 = vld [vmem:[#allocation8 + $0x108] sm:$0xff]
    %v1168 = vld [vmem:[#allocation8 + $0x110] sm:$0xff]
    %v1169 = vld [vmem:[#allocation8 + $0x118] sm:$0xff]
    %v1170 = vld [vmem:[#allocation8 + $0x120] sm:$0xff]
    %v1171 = vld [vmem:[#allocation8 + $0x128] sm:$0xff]
    %v1172 = vld [vmem:[#allocation8 + $0x130] sm:$0xff]
    %v1173 = vld [vmem:[#allocation8 + $0x138] sm:$0xff]
    %v1174 = vld [vmem:[#allocation8 + $0x140] sm:$0xff]
    %v1175 = vld [vmem:[#allocation8 + $0x148] sm:$0xff]
    %v1176 = vld [vmem:[#allocation8 + $0x150] sm:$0xff]
    %v1177 = vld [vmem:[#allocation8 + $0x158] sm:$0xff]
    %v1178 = vld [vmem:[#allocation8 + $0x160] sm:$0xff]
    %v1179 = vld [vmem:[#allocation8 + $0x168] sm:$0xff]
    %v1180 = vld [vmem:[#allocation8 + $0x170] sm:$0xff]
    %v1181 = vld [vmem:[#allocation8 + $0x178] sm:$0xff]
    %v1182 = vld [vmem:[#allocation8 + $0x180] sm:$0xff]
    %v1183 = vld [vmem:[#allocation8 + $0x188] sm:$0xff]
    %v1184 = vld [vmem:[#allocation8 + $0x190] sm:$0xff]
    %v1185 = vld [vmem:[#allocation8 + $0x198] sm:$0xff]
    %v1186 = vld [vmem:[#allocation8 + $0x1a0] sm:$0xff]
    %v1187 = vld [vmem:[#allocation8 + $0x1a8] sm:$0xff]
    %v1188 = vld [vmem:[#allocation8 + $0x1b0] sm:$0xff]
    %v1189 = vld [vmem:[#allocation8 + $0x1b8] sm:$0xff]
    %v1190 = vld [vmem:[#allocation8 + $0x1c0] sm:$0xff]
    %v1191 = vld [vmem:[#allocation8 + $0x1c8] sm:$0xff]
    %v1192 = vld [vmem:[#allocation8 + $0x1d0] sm:$0xff]
    %v1193 = vld [vmem:[#allocation8 + $0x1d8] sm:$0xff]
    %v1194 = vld [vmem:[#allocation8 + $0x1e0] sm:$0xff]
    %v1195 = vld [vmem:[#allocation8 + $0x1e8] sm:$0xff]
    %v1196 = vld [vmem:[#allocation8 + $0x1f0] sm:$0xff]
    %v1197 = vld [vmem:[#allocation8 + $0x1f8] sm:$0xff]
    %v1198 = vld [vmem:[#allocation10] sm:$0x3]
    %v1200 = vperm.slane %v1198, 0
    %v1201 = vperm.slane %v1198, 1
    %v1268 = vunpack.c.l.b16 %v1134
    %v1269 = vunpack.c.h.b16 %v1134
    %v1270 = vunpack.c.l.b16 %v1135
    %v1271 = vunpack.c.h.b16 %v1135
    %v1272 = vunpack.c.l.b16 %v1136
    %v1273 = vunpack.c.h.b16 %v1136
    %v1274 = vunpack.c.l.b16 %v1137
    %v1275 = vunpack.c.h.b16 %v1137
    %v1276 = vunpack.c.l.b16 %v1138
    %v1277 = vunpack.c.h.b16 %v1138
    %v1278 = vunpack.c.l.b16 %v1139
    %v1279 = vunpack.c.h.b16 %v1139
    %v1280 = vunpack.c.l.b16 %v1140
    %v1281 = vunpack.c.h.b16 %v1140
    %v1282 = vunpack.c.l.b16 %v1141
    %v1283 = vunpack.c.h.b16 %v1141
    %v1284 = vunpack.c.l.b16 %v1142
    %v1285 = vunpack.c.h.b16 %v1142
    %v1286 = vunpack.c.l.b16 %v1143
    %v1287 = vunpack.c.h.b16 %v1143
    %v1288 = vunpack.c.l.b16 %v1144
    %v1289 = vunpack.c.h.b16 %v1144
    %v1290 = vunpack.c.l.b16 %v1145
    %v1291 = vunpack.c.h.b16 %v1145
    %v1292 = vunpack.c.l.b16 %v1146
    %v1293 = vunpack.c.h.b16 %v1146
    %v1294 = vunpack.c.l.b16 %v1147
    %v1295 = vunpack.c.h.b16 %v1147
    %v1296 = vunpack.c.l.b16 %v1148
    %v1297 = vunpack.c.h.b16 %v1148
    %v1298 = vunpack.c.l.b16 %v1149
    %v1299 = vunpack.c.h.b16 %v1149
    %v1300 = vunpack.c.l.b16 %v1150
    %v1301 = vunpack.c.h.b16 %v1150
    %v1302 = vunpack.c.l.b16 %v1151
    %v1303 = vunpack.c.h.b16 %v1151
    %v1304 = vunpack.c.l.b16 %v1152
    %v1305 = vunpack.c.h.b16 %v1152
    %v1306 = vunpack.c.l.b16 %v1153
    %v1307 = vunpack.c.h.b16 %v1153
    %v1308 = vunpack.c.l.b16 %v1154
    %v1309 = vunpack.c.h.b16 %v1154
    %v1310 = vunpack.c.l.b16 %v1155
    %v1311 = vunpack.c.h.b16 %v1155
    %v1312 = vunpack.c.l.b16 %v1156
    %v1313 = vunpack.c.h.b16 %v1156
    %v1314 = vunpack.c.l.b16 %v1157
    %v1315 = vunpack.c.h.b16 %v1157
    %v1316 = vunpack.c.l.b16 %v1158
    %v1317 = vunpack.c.h.b16 %v1158
    %v1318 = vunpack.c.l.b16 %v1159
    %v1319 = vunpack.c.h.b16 %v1159
    %v1320 = vunpack.c.l.b16 %v1160
    %v1321 = vunpack.c.h.b16 %v1160
    %v1322 = vunpack.c.l.b16 %v1161
    %v1323 = vunpack.c.h.b16 %v1161
    %v1324 = vunpack.c.l.b16 %v1162
    %v1325 = vunpack.c.h.b16 %v1162
    %v1326 = vunpack.c.l.b16 %v1163
    %v1327 = vunpack.c.h.b16 %v1163
    %v1328 = vunpack.c.l.b16 %v1164
    %v1329 = vunpack.c.h.b16 %v1164
    %v1330 = vunpack.c.l.b16 %v1165
    %v1331 = vunpack.c.h.b16 %v1165
    %v1332 = vunpack.c.l.b16 %v1166
    %v1333 = vunpack.c.h.b16 %v1166
    %v1334 = vunpack.c.l.b16 %v1167
    %v1335 = vunpack.c.h.b16 %v1167
    %v1336 = vunpack.c.l.b16 %v1168
    %v1337 = vunpack.c.h.b16 %v1168
    %v1338 = vunpack.c.l.b16 %v1169
    %v1339 = vunpack.c.h.b16 %v1169
    %v1340 = vunpack.c.l.b16 %v1170
    %v1341 = vunpack.c.h.b16 %v1170
    %v1342 = vunpack.c.l.b16 %v1171
    %v1343 = vunpack.c.h.b16 %v1171
    %v1344 = vunpack.c.l.b16 %v1172
    %v1345 = vunpack.c.h.b16 %v1172
    %v1346 = vunpack.c.l.b16 %v1173
    %v1347 = vunpack.c.h.b16 %v1173
    %v1348 = vunpack.c.l.b16 %v1174
    %v1349 = vunpack.c.h.b16 %v1174
    %v1350 = vunpack.c.l.b16 %v1175
    %v1351 = vunpack.c.h.b16 %v1175
    %v1352 = vunpack.c.l.b16 %v1176
    %v1353 = vunpack.c.h.b16 %v1176
    %v1354 = vunpack.c.l.b16 %v1177
    %v1355 = vunpack.c.h.b16 %v1177
    %v1356 = vunpack.c.l.b16 %v1178
    %v1357 = vunpack.c.h.b16 %v1178
    %v1358 = vunpack.c.l.b16 %v1179
    %v1359 = vunpack.c.h.b16 %v1179
    %v1360 = vunpack.c.l.b16 %v1180
    %v1361 = vunpack.c.h.b16 %v1180
    %v1362 = vunpack.c.l.b16 %v1181
    %v1363 = vunpack.c.h.b16 %v1181
    %v1364 = vunpack.c.l.b16 %v1182
    %v1365 = vunpack.c.h.b16 %v1182
    %v1366 = vunpack.c.l.b16 %v1183
    %v1367 = vunpack.c.h.b16 %v1183
    %v1368 = vunpack.c.l.b16 %v1184
    %v1369 = vunpack.c.h.b16 %v1184
    %v1370 = vunpack.c.l.b16 %v1185
    %v1371 = vunpack.c.h.b16 %v1185
    %v1372 = vunpack.c.l.b16 %v1186
    %v1373 = vunpack.c.h.b16 %v1186
    %v1374 = vunpack.c.l.b16 %v1187
    %v1375 = vunpack.c.h.b16 %v1187
    %v1376 = vunpack.c.l.b16 %v1188
    %v1377 = vunpack.c.h.b16 %v1188
    %v1378 = vunpack.c.l.b16 %v1189
    %v1379 = vunpack.c.h.b16 %v1189
    %v1380 = vunpack.c.l.b16 %v1190
    %v1381 = vunpack.c.h.b16 %v1190
    %v1382 = vunpack.c.l.b16 %v1191
    %v1383 = vunpack.c.h.b16 %v1191
    %v1384 = vunpack.c.l.b16 %v1192
    %v1385 = vunpack.c.h.b16 %v1192
    %v1386 = vunpack.c.l.b16 %v1193
    %v1387 = vunpack.c.h.b16 %v1193
    %v1388 = vunpack.c.l.b16 %v1194
    %v1389 = vunpack.c.h.b16 %v1194
    %v1390 = vunpack.c.l.b16 %v1195
    %v1391 = vunpack.c.h.b16 %v1195
    %v1392 = vunpack.c.l.b16 %v1196
    %v1393 = vunpack.c.h.b16 %v1196
    %v1394 = vunpack.c.l.b16 %v1197
    %v1395 = vunpack.c.h.b16 %v1197
    %v1396 = vpack.c.b16 %v1270, %v1268
    %v1397 = vpack.c.b16 %v1271, %v1269
    %v1398 = vpack.c.b16 %v1274, %v1272
    %v1399 = vpack.c.b16 %v1275, %v1273
    %v1400 = vpack.c.b16 %v1278, %v1276
    %v1401 = vpack.c.b16 %v1279, %v1277
    %v1402 = vpack.c.b16 %v1282, %v1280
    %v1403 = vpack.c.b16 %v1283, %v1281
    %v1404 = vpack.c.b16 %v1286, %v1284
    %v1405 = vpack.c.b16 %v1287, %v1285
    %v1406 = vpack.c.b16 %v1290, %v1288
    %v1407 = vpack.c.b16 %v1291, %v1289
    %v1408 = vpack.c.b16 %v1294, %v1292
    %v1409 = vpack.c.b16 %v1295, %v1293
    %v1410 = vpack.c.b16 %v1298, %v1296
    %v1411 = vpack.c.b16 %v1299, %v1297
    %v1412 = vpack.c.b16 %v1302, %v1300
    %v1413 = vpack.c.b16 %v1303, %v1301
    %v1414 = vpack.c.b16 %v1306, %v1304
    %v1415 = vpack.c.b16 %v1307, %v1305
    %v1416 = vpack.c.b16 %v1310, %v1308
    %v1417 = vpack.c.b16 %v1311, %v1309
    %v1418 = vpack.c.b16 %v1314, %v1312
    %v1419 = vpack.c.b16 %v1315, %v1313
    %v1420 = vpack.c.b16 %v1318, %v1316
    %v1421 = vpack.c.b16 %v1319, %v1317
    %v1422 = vpack.c.b16 %v1322, %v1320
    %v1423 = vpack.c.b16 %v1323, %v1321
    %v1424 = vpack.c.b16 %v1326, %v1324
    %v1425 = vpack.c.b16 %v1327, %v1325
    %v1426 = vpack.c.b16 %v1330, %v1328
    %v1427 = vpack.c.b16 %v1331, %v1329
    %v1428 = vpack.c.b16 %v1334, %v1332
    %v1429 = vpack.c.b16 %v1335, %v1333
    %v1430 = vpack.c.b16 %v1338, %v1336
    %v1431 = vpack.c.b16 %v1339, %v1337
    %v1432 = vpack.c.b16 %v1342, %v1340
    %v1433 = vpack.c.b16 %v1343, %v1341
    %v1434 = vpack.c.b16 %v1346, %v1344
    %v1435 = vpack.c.b16 %v1347, %v1345
    %v1436 = vpack.c.b16 %v1350, %v1348
    %v1437 = vpack.c.b16 %v1351, %v1349
    %v1438 = vpack.c.b16 %v1354, %v1352
    %v1439 = vpack.c.b16 %v1355, %v1353
    %v1440 = vpack.c.b16 %v1358, %v1356
    %v1441 = vpack.c.b16 %v1359, %v1357
    %v1442 = vpack.c.b16 %v1362, %v1360
    %v1443 = vpack.c.b16 %v1363, %v1361
    %v1444 = vpack.c.b16 %v1366, %v1364
    %v1445 = vpack.c.b16 %v1367, %v1365
    %v1446 = vpack.c.b16 %v1370, %v1368
    %v1447 = vpack.c.b16 %v1371, %v1369
    %v1448 = vpack.c.b16 %v1374, %v1372
    %v1449 = vpack.c.b16 %v1375, %v1373
    %v1450 = vpack.c.b16 %v1378, %v1376
    %v1451 = vpack.c.b16 %v1379, %v1377
    %v1452 = vpack.c.b16 %v1382, %v1380
    %v1453 = vpack.c.b16 %v1383, %v1381
    %v1454 = vpack.c.b16 %v1386, %v1384
    %v1455 = vpack.c.b16 %v1387, %v1385
    %v1456 = vpack.c.b16 %v1390, %v1388
    %v1457 = vpack.c.b16 %v1391, %v1389
    %v1458 = vpack.c.b16 %v1394, %v1392
    %v1459 = vpack.c.b16 %v1395, %v1393
    %1524 = vmatpush.bf16.msra.mxu0 %v1410
    %1525 = vmatpush.bf16.msra.mxu0 %v1408
    %1526 = vmatpush.bf16.msra.mxu0 %v1406
    %1527 = vmatpush.bf16.msra.mxu0 %v1404
    %1528 = vmatpush.bf16.msra.mxu0 %v1402
    %1529 = vmatpush.bf16.msra.mxu0 %v1400
    %1530 = vmatpush.bf16.msra.mxu0 %v1398
    %1531 = vmatpush.bf16.msra.mxu0 %v1396
    %1532 = vmatmul.bf16.gmra.mxu0 %v1118
    %v1533 = vpop.f32.mrf.mxu0
    %v1534 = vadd.f32 %v1200, %v1533
    %v1535 = vpop.f32.mrf.mxu0
    %v1536 = vadd.f32 %v1200, %v1535
    %1537 = vmatmul.bf16.gmra.mxu0 %v1122
    %v1538 = vpop.f32.mrf.mxu0
    %v1539 = vadd.f32 %v1200, %v1538
    %v1540 = vpop.f32.mrf.mxu0
    %v1541 = vadd.f32 %v1200, %v1540
    %1542 = vmatmul.bf16.gmra.mxu0 %v1126
    %v1543 = vpop.f32.mrf.mxu0
    %v1544 = vadd.f32 %v1200, %v1543
    %v1545 = vpop.f32.mrf.mxu0
    %v1546 = vadd.f32 %v1200, %v1545
    %1547 = vmatmul.bf16.gmra.mxu0 %v1130
    %v1548 = vpop.f32.mrf.mxu0
    %v1549 = vadd.f32 %v1200, %v1548
    %v1550 = vpop.f32.mrf.mxu0
    %v1551 = vadd.f32 %v1200, %v1550
    %1552 = vdwg.mxu0
    %1553 = vmatpush.bf16.msra.mxu0 %v1426
    %1554 = vmatpush.bf16.msra.mxu0 %v1424
    %1555 = vmatpush.bf16.msra.mxu0 %v1422
    %1556 = vmatpush.bf16.msra.mxu0 %v1420
    %1557 = vmatpush.bf16.msra.mxu0 %v1418
    %1558 = vmatpush.bf16.msra.mxu0 %v1416
    %1559 = vmatpush.bf16.msra.mxu0 %v1414
    %1560 = vmatpush.bf16.msra.mxu0 %v1412
    %1561 = vmatmul.bf16.gmra.mxu0 %v1119
    %v1562 = vpop.f32.mrf.mxu0
    %v1563 = vadd.f32 %v1534, %v1562
    %v1564 = vpop.f32.mrf.mxu0
    %v1565 = vadd.f32 %v1536, %v1564
    %1566 = vmatmul.bf16.gmra.mxu0 %v1123
    %v1567 = vpop.f32.mrf.mxu0
    %v1568 = vadd.f32 %v1539, %v1567
    %v1569 = vpop.f32.mrf.mxu0
    %v1570 = vadd.f32 %v1541, %v1569
    %1571 = vmatmul.bf16.gmra.mxu0 %v1127
    %v1572 = vpop.f32.mrf.mxu0
    %v1573 = vadd.f32 %v1544, %v1572
    %v1574 = vpop.f32.mrf.mxu0
    %v1575 = vadd.f32 %v1546, %v1574
    %1576 = vmatmul.bf16.gmra.mxu0 %v1131
    %v1577 = vpop.f32.mrf.mxu0
    %v1578 = vadd.f32 %v1549, %v1577
    %v1579 = vpop.f32.mrf.mxu0
    %v1580 = vadd.f32 %v1551, %v1579
    %1581 = vdwg.mxu0
    %1582 = vmatpush.bf16.msra.mxu0 %v1442
    %1583 = vmatpush.bf16.msra.mxu0 %v1440
    %1584 = vmatpush.bf16.msra.mxu0 %v1438
    %1585 = vmatpush.bf16.msra.mxu0 %v1436
    %1586 = vmatpush.bf16.msra.mxu0 %v1434
    %1587 = vmatpush.bf16.msra.mxu0 %v1432
    %1588 = vmatpush.bf16.msra.mxu0 %v1430
    %1589 = vmatpush.bf16.msra.mxu0 %v1428
    %1590 = vmatmul.bf16.gmra.mxu0 %v1120
    %v1591 = vpop.f32.mrf.mxu0
    %v1592 = vadd.f32 %v1563, %v1591
    %v1593 = vpop.f32.mrf.mxu0
    %v1594 = vadd.f32 %v1565, %v1593
    %1595 = vmatmul.bf16.gmra.mxu0 %v1124
    %v1596 = vpop.f32.mrf.mxu0
    %v1597 = vadd.f32 %v1568, %v1596
    %v1598 = vpop.f32.mrf.mxu0
    %v1599 = vadd.f32 %v1570, %v1598
    %1600 = vmatmul.bf16.gmra.mxu0 %v1128
    %v1601 = vpop.f32.mrf.mxu0
    %v1602 = vadd.f32 %v1573, %v1601
    %v1603 = vpop.f32.mrf.mxu0
    %v1604 = vadd.f32 %v1575, %v1603
    %1605 = vmatmul.bf16.gmra.mxu0 %v1132
    %v1606 = vpop.f32.mrf.mxu0
    %v1607 = vadd.f32 %v1578, %v1606
    %v1608 = vpop.f32.mrf.mxu0
    %v1609 = vadd.f32 %v1580, %v1608
    %1610 = vdwg.mxu0
    %1611 = vmatpush.bf16.msra.mxu0 %v1458
    %1612 = vmatpush.bf16.msra.mxu0 %v1456
    %1613 = vmatpush.bf16.msra.mxu0 %v1454
    %1614 = vmatpush.bf16.msra.mxu0 %v1452
    %1615 = vmatpush.bf16.msra.mxu0 %v1450
    %1616 = vmatpush.bf16.msra.mxu0 %v1448
    %1617 = vmatpush.bf16.msra.mxu0 %v1446
    %1618 = vmatpush.bf16.msra.mxu0 %v1444
    %1619 = vmatmul.bf16.gmra.mxu0 %v1121
    %v1620 = vpop.f32.mrf.mxu0
    %v1621 = vadd.f32 %v1592, %v1620
    %v1622 = vpop.f32.mrf.mxu0
    %v1623 = vadd.f32 %v1594, %v1622
    %1624 = vmatmul.bf16.gmra.mxu0 %v1125
    %v1625 = vpop.f32.mrf.mxu0
    %v1626 = vadd.f32 %v1597, %v1625
    %v1627 = vpop.f32.mrf.mxu0
    %v1628 = vadd.f32 %v1599, %v1627
    %1629 = vmatmul.bf16.gmra.mxu0 %v1129
    %v1630 = vpop.f32.mrf.mxu0
    %v1631 = vadd.f32 %v1602, %v1630
    %v1632 = vpop.f32.mrf.mxu0
    %v1633 = vadd.f32 %v1604, %v1632
    %1634 = vmatmul.bf16.gmra.mxu0 %v1133
    %v1635 = vpop.f32.mrf.mxu0
    %v1636 = vadd.f32 %v1607, %v1635
    %v1637 = vpop.f32.mrf.mxu0
    %v1638 = vadd.f32 %v1609, %v1637
    %1639 = vdwg.mxu0
    %1640 = vmatpush.bf16.msra.mxu0 %v1411
    %1641 = vmatpush.bf16.msra.mxu0 %v1409
    %1642 = vmatpush.bf16.msra.mxu0 %v1407
    %1643 = vmatpush.bf16.msra.mxu0 %v1405
    %1644 = vmatpush.bf16.msra.mxu0 %v1403
    %1645 = vmatpush.bf16.msra.mxu0 %v1401
    %1646 = vmatpush.bf16.msra.mxu0 %v1399
    %1647 = vmatpush.bf16.msra.mxu0 %v1397
    %1648 = vmatmul.bf16.gmra.mxu0 %v1118
    %v1649 = vpop.f32.mrf.mxu0
    %v1650 = vadd.f32 %v1201, %v1649
    %v1651 = vpop.f32.mrf.mxu0
    %v1652 = vadd.f32 %v1201, %v1651
    %1653 = vmatmul.bf16.gmra.mxu0 %v1122
    %v1654 = vpop.f32.mrf.mxu0
    %v1655 = vadd.f32 %v1201, %v1654
    %v1656 = vpop.f32.mrf.mxu0
    %v1657 = vadd.f32 %v1201, %v1656
    %1658 = vmatmul.bf16.gmra.mxu0 %v1126
    %v1659 = vpop.f32.mrf.mxu0
    %v1660 = vadd.f32 %v1201, %v1659
    %v1661 = vpop.f32.mrf.mxu0
    %v1662 = vadd.f32 %v1201, %v1661
    %1663 = vmatmul.bf16.gmra.mxu0 %v1130
    %v1664 = vpop.f32.mrf.mxu0
    %v1665 = vadd.f32 %v1201, %v1664
    %v1666 = vpop.f32.mrf.mxu0
    %v1667 = vadd.f32 %v1201, %v1666
    %1668 = vdwg.mxu0
    %1669 = vmatpush.bf16.msra.mxu0 %v1427
    %1670 = vmatpush.bf16.msra.mxu0 %v1425
    %1671 = vmatpush.bf16.msra.mxu0 %v1423
    %1672 = vmatpush.bf16.msra.mxu0 %v1421
    %1673 = vmatpush.bf16.msra.mxu0 %v1419
    %1674 = vmatpush.bf16.msra.mxu0 %v1417
    %1675 = vmatpush.bf16.msra.mxu0 %v1415
    %1676 = vmatpush.bf16.msra.mxu0 %v1413
    %1677 = vmatmul.bf16.gmra.mxu0 %v1119
    %v1678 = vpop.f32.mrf.mxu0
    %v1679 = vadd.f32 %v1650, %v1678
    %v1680 = vpop.f32.mrf.mxu0
    %v1681 = vadd.f32 %v1652, %v1680
    %1682 = vmatmul.bf16.gmra.mxu0 %v1123
    %v1683 = vpop.f32.mrf.mxu0
    %v1684 = vadd.f32 %v1655, %v1683
    %v1685 = vpop.f32.mrf.mxu0
    %v1686 = vadd.f32 %v1657, %v1685
    %1687 = vmatmul.bf16.gmra.mxu0 %v1127
    %v1688 = vpop.f32.mrf.mxu0
    %v1689 = vadd.f32 %v1660, %v1688
    %v1690 = vpop.f32.mrf.mxu0
    %v1691 = vadd.f32 %v1662, %v1690
    %1692 = vmatmul.bf16.gmra.mxu0 %v1131
    %v1693 = vpop.f32.mrf.mxu0
    %v1694 = vadd.f32 %v1665, %v1693
    %v1695 = vpop.f32.mrf.mxu0
    %v1696 = vadd.f32 %v1667, %v1695
    %1697 = vdwg.mxu0
    %1698 = vmatpush.bf16.msra.mxu0 %v1443
    %1699 = vmatpush.bf16.msra.mxu0 %v1441
    %1700 = vmatpush.bf16.msra.mxu0 %v1439
    %1701 = vmatpush.bf16.msra.mxu0 %v1437
    %1702 = vmatpush.bf16.msra.mxu0 %v1435
    %1703 = vmatpush.bf16.msra.mxu0 %v1433
    %1704 = vmatpush.bf16.msra.mxu0 %v1431
    %1705 = vmatpush.bf16.msra.mxu0 %v1429
    %1706 = vmatmul.bf16.gmra.mxu0 %v1120
    %v1707 = vpop.f32.mrf.mxu0
    %v1708 = vadd.f32 %v1679, %v1707
    %v1709 = vpop.f32.mrf.mxu0
    %v1710 = vadd.f32 %v1681, %v1709
    %1711 = vmatmul.bf16.gmra.mxu0 %v1124
    %v1712 = vpop.f32.mrf.mxu0
    %v1713 = vadd.f32 %v1684, %v1712
    %v1714 = vpop.f32.mrf.mxu0
    %v1715 = vadd.f32 %v1686, %v1714
    %1716 = vmatmul.bf16.gmra.mxu0 %v1128
    %v1717 = vpop.f32.mrf.mxu0
    %v1718 = vadd.f32 %v1689, %v1717
    %v1719 = vpop.f32.mrf.mxu0
    %v1720 = vadd.f32 %v1691, %v1719
    %1721 = vmatmul.bf16.gmra.mxu0 %v1132
    %v1722 = vpop.f32.mrf.mxu0
    %v1723 = vadd.f32 %v1694, %v1722
    %v1724 = vpop.f32.mrf.mxu0
    %v1725 = vadd.f32 %v1696, %v1724
    %1726 = vdwg.mxu0
    %1727 = vmatpush.bf16.msra.mxu0 %v1459
    %1728 = vmatpush.bf16.msra.mxu0 %v1457
    %1729 = vmatpush.bf16.msra.mxu0 %v1455
    %1730 = vmatpush.bf16.msra.mxu0 %v1453
    %1731 = vmatpush.bf16.msra.mxu0 %v1451
    %1732 = vmatpush.bf16.msra.mxu0 %v1449
    %1733 = vmatpush.bf16.msra.mxu0 %v1447
    %1734 = vmatpush.bf16.msra.mxu0 %v1445
    %1735 = vmatmul.bf16.gmra.mxu0 %v1121
    %v1736 = vpop.f32.mrf.mxu0
    %v1737 = vadd.f32 %v1708, %v1736
    %v1738 = vpop.f32.mrf.mxu0
    %v1739 = vadd.f32 %v1710, %v1738
    %1740 = vmatmul.bf16.gmra.mxu0 %v1125
    %v1741 = vpop.f32.mrf.mxu0
    %v1742 = vadd.f32 %v1713, %v1741
    %v1743 = vpop.f32.mrf.mxu0
    %v1744 = vadd.f32 %v1715, %v1743
    %1745 = vmatmul.bf16.gmra.mxu0 %v1129
    %v1746 = vpop.f32.mrf.mxu0
    %v1747 = vadd.f32 %v1718, %v1746
    %v1748 = vpop.f32.mrf.mxu0
    %v1749 = vadd.f32 %v1720, %v1748
    %1750 = vmatmul.bf16.gmra.mxu0 %v1133
    %v1751 = vpop.f32.mrf.mxu0
    %v1752 = vadd.f32 %v1723, %v1751
    %v1753 = vpop.f32.mrf.mxu0
    %v1754 = vadd.f32 %v1725, %v1753
    %1755 = vdwg.mxu0
    %v1756 = vmax.f32 %v1621, 0.0
    %v1757 = vmax.f32 %v1737, 0.0
    %v1758 = vmax.f32 %v1623, 0.0
    %v1759 = vmax.f32 %v1739, 0.0
    %v1760 = vmax.f32 %v1626, 0.0
    %v1761 = vmax.f32 %v1742, 0.0
    %v1762 = vmax.f32 %v1628, 0.0
    %v1763 = vmax.f32 %v1744, 0.0
    %v1764 = vmax.f32 %v1631, 0.0
    %v1765 = vmax.f32 %v1747, 0.0
    %v1766 = vmax.f32 %v1633, 0.0
    %v1767 = vmax.f32 %v1749, 0.0
    %v1768 = vmax.f32 %v1636, 0.0
    %v1769 = vmax.f32 %v1752, 0.0
    %v1770 = vmax.f32 %v1638, 0.0
    %v1771 = vmax.f32 %v1754, 0.0
    %v1772 = vpack.c.bf16 %v1758, %v1756
    %v1773 = vpack.c.bf16 %v1759, %v1757
    %v1774 = vpack.c.bf16 %v1762, %v1760
    %v1775 = vpack.c.bf16 %v1763, %v1761
    %v1776 = vpack.c.bf16 %v1766, %v1764
    %v1777 = vpack.c.bf16 %v1767, %v1765
    %v1778 = vpack.c.bf16 %v1770, %v1768
    %v1779 = vpack.c.bf16 %v1771, %v1769
    %v1780 = vld [vmem:[#allocation11] sm:$0xff]
    %v1781 = vld [vmem:[#allocation11 + $0x8] sm:$0xff]
    %v1782 = vld [vmem:[#allocation11 + $0x10] sm:$0xff]
    %v1783 = vld [vmem:[#allocation11 + $0x18] sm:$0xff]
    %v1784 = vld [vmem:[#allocation11 + $0x20] sm:$0xff]
    %v1785 = vld [vmem:[#allocation11 + $0x28] sm:$0xff]
    %v1786 = vld [vmem:[#allocation11 + $0x30] sm:$0xff]
    %v1787 = vld [vmem:[#allocation11 + $0x38] sm:$0xff]
    %v1788 = vld [vmem:[#allocation11 + $0x40] sm:$0xff]
    %v1789 = vld [vmem:[#allocation11 + $0x48] sm:$0xff]
    %v1790 = vld [vmem:[#allocation11 + $0x50] sm:$0xff]
    %v1791 = vld [vmem:[#allocation11 + $0x58] sm:$0xff]
    %v1792 = vld [vmem:[#allocation11 + $0x60] sm:$0xff]
    %v1793 = vld [vmem:[#allocation11 + $0x68] sm:$0xff]
    %v1794 = vld [vmem:[#allocation11 + $0x70] sm:$0xff]
    %v1795 = vld [vmem:[#allocation11 + $0x78] sm:$0xff]
    %v1796 = vld [vmem:[#allocation11 + $0x80] sm:$0xff]
    %v1797 = vld [vmem:[#allocation11 + $0x88] sm:$0xff]
    %v1798 = vld [vmem:[#allocation11 + $0x90] sm:$0xff]
    %v1799 = vld [vmem:[#allocation11 + $0x98] sm:$0xff]
    %v1800 = vld [vmem:[#allocation11 + $0xa0] sm:$0xff]
    %v1801 = vld [vmem:[#allocation11 + $0xa8] sm:$0xff]
    %v1802 = vld [vmem:[#allocation11 + $0xb0] sm:$0xff]
    %v1803 = vld [vmem:[#allocation11 + $0xb8] sm:$0xff]
    %v1804 = vld [vmem:[#allocation11 + $0xc0] sm:$0xff]
    %v1805 = vld [vmem:[#allocation11 + $0xc8] sm:$0xff]
    %v1806 = vld [vmem:[#allocation11 + $0xd0] sm:$0xff]
    %v1807 = vld [vmem:[#allocation11 + $0xd8] sm:$0xff]
    %v1808 = vld [vmem:[#allocation11 + $0xe0] sm:$0xff]
    %v1809 = vld [vmem:[#allocation11 + $0xe8] sm:$0xff]
    %v1810 = vld [vmem:[#allocation11 + $0xf0] sm:$0xff]
    %v1811 = vld [vmem:[#allocation11 + $0xf8] sm:$0xff]
    %v1812 = vld [vmem:[#allocation11 + $0x100] sm:$0xff]
    %v1813 = vld [vmem:[#allocation11 + $0x108] sm:$0xff]
    %v1814 = vld [vmem:[#allocation11 + $0x110] sm:$0xff]
    %v1815 = vld [vmem:[#allocation11 + $0x118] sm:$0xff]
    %v1816 = vld [vmem:[#allocation11 + $0x120] sm:$0xff]
    %v1817 = vld [vmem:[#allocation11 + $0x128] sm:$0xff]
    %v1818 = vld [vmem:[#allocation11 + $0x130] sm:$0xff]
    %v1819 = vld [vmem:[#allocation11 + $0x138] sm:$0xff]
    %v1820 = vld [vmem:[#allocation11 + $0x140] sm:$0xff]
    %v1821 = vld [vmem:[#allocation11 + $0x148] sm:$0xff]
    %v1822 = vld [vmem:[#allocation11 + $0x150] sm:$0xff]
    %v1823 = vld [vmem:[#allocation11 + $0x158] sm:$0xff]
    %v1824 = vld [vmem:[#allocation11 + $0x160] sm:$0xff]
    %v1825 = vld [vmem:[#allocation11 + $0x168] sm:$0xff]
    %v1826 = vld [vmem:[#allocation11 + $0x170] sm:$0xff]
    %v1827 = vld [vmem:[#allocation11 + $0x178] sm:$0xff]
    %v1828 = vld [vmem:[#allocation11 + $0x180] sm:$0xff]
    %v1829 = vld [vmem:[#allocation11 + $0x188] sm:$0xff]
    %v1830 = vld [vmem:[#allocation11 + $0x190] sm:$0xff]
    %v1831 = vld [vmem:[#allocation11 + $0x198] sm:$0xff]
    %v1832 = vld [vmem:[#allocation11 + $0x1a0] sm:$0xff]
    %v1833 = vld [vmem:[#allocation11 + $0x1a8] sm:$0xff]
    %v1834 = vld [vmem:[#allocation11 + $0x1b0] sm:$0xff]
    %v1835 = vld [vmem:[#allocation11 + $0x1b8] sm:$0xff]
    %v1836 = vld [vmem:[#allocation11 + $0x1c0] sm:$0xff]
    %v1837 = vld [vmem:[#allocation11 + $0x1c8] sm:$0xff]
    %v1838 = vld [vmem:[#allocation11 + $0x1d0] sm:$0xff]
    %v1839 = vld [vmem:[#allocation11 + $0x1d8] sm:$0xff]
    %v1840 = vld [vmem:[#allocation11 + $0x1e0] sm:$0xff]
    %v1841 = vld [vmem:[#allocation11 + $0x1e8] sm:$0xff]
    %v1842 = vld [vmem:[#allocation11 + $0x1f0] sm:$0xff]
    %v1843 = vld [vmem:[#allocation11 + $0x1f8] sm:$0xff]
    %v1844 = vld [vmem:[%s6] sm:$0xf]
    %v1846 = vperm.slane %v1844, 0
    %v1847 = vperm.slane %v1844, 1
    %v1848 = vperm.slane %v1844, 2
    %v1849 = vperm.slane %v1844, 3
    %v1918 = vunpack.c.l.b16 %v1780
    %v1919 = vunpack.c.h.b16 %v1780
    %v1920 = vunpack.c.l.b16 %v1781
    %v1921 = vunpack.c.h.b16 %v1781
    %v1922 = vunpack.c.l.b16 %v1782
    %v1923 = vunpack.c.h.b16 %v1782
    %v1924 = vunpack.c.l.b16 %v1783
    %v1925 = vunpack.c.h.b16 %v1783
    %v1926 = vunpack.c.l.b16 %v1784
    %v1927 = vunpack.c.h.b16 %v1784
    %v1928 = vunpack.c.l.b16 %v1785
    %v1929 = vunpack.c.h.b16 %v1785
    %v1930 = vunpack.c.l.b16 %v1786
    %v1931 = vunpack.c.h.b16 %v1786
    %v1932 = vunpack.c.l.b16 %v1787
    %v1933 = vunpack.c.h.b16 %v1787
    %v1934 = vunpack.c.l.b16 %v1788
    %v1935 = vunpack.c.h.b16 %v1788
    %v1936 = vunpack.c.l.b16 %v1789
    %v1937 = vunpack.c.h.b16 %v1789
    %v1938 = vunpack.c.l.b16 %v1790
    %v1939 = vunpack.c.h.b16 %v1790
    %v1940 = vunpack.c.l.b16 %v1791
    %v1941 = vunpack.c.h.b16 %v1791
    %v1942 = vunpack.c.l.b16 %v1792
    %v1943 = vunpack.c.h.b16 %v1792
    %v1944 = vunpack.c.l.b16 %v1793
    %v1945 = vunpack.c.h.b16 %v1793
    %v1946 = vunpack.c.l.b16 %v1794
    %v1947 = vunpack.c.h.b16 %v1794
    %v1948 = vunpack.c.l.b16 %v1795
    %v1949 = vunpack.c.h.b16 %v1795
    %v1950 = vunpack.c.l.b16 %v1796
    %v1951 = vunpack.c.h.b16 %v1796
    %v1952 = vunpack.c.l.b16 %v1797
    %v1953 = vunpack.c.h.b16 %v1797
    %v1954 = vunpack.c.l.b16 %v1798
    %v1955 = vunpack.c.h.b16 %v1798
    %v1956 = vunpack.c.l.b16 %v1799
    %v1957 = vunpack.c.h.b16 %v1799
    %v1958 = vunpack.c.l.b16 %v1800
    %v1959 = vunpack.c.h.b16 %v1800
    %v1960 = vunpack.c.l.b16 %v1801
    %v1961 = vunpack.c.h.b16 %v1801
    %v1962 = vunpack.c.l.b16 %v1802
    %v1963 = vunpack.c.h.b16 %v1802
    %v1964 = vunpack.c.l.b16 %v1803
    %v1965 = vunpack.c.h.b16 %v1803
    %v1966 = vunpack.c.l.b16 %v1804
    %v1967 = vunpack.c.h.b16 %v1804
    %v1968 = vunpack.c.l.b16 %v1805
    %v1969 = vunpack.c.h.b16 %v1805
    %v1970 = vunpack.c.l.b16 %v1806
    %v1971 = vunpack.c.h.b16 %v1806
    %v1972 = vunpack.c.l.b16 %v1807
    %v1973 = vunpack.c.h.b16 %v1807
    %v1974 = vunpack.c.l.b16 %v1808
    %v1975 = vunpack.c.h.b16 %v1808
    %v1976 = vunpack.c.l.b16 %v1809
    %v1977 = vunpack.c.h.b16 %v1809
    %v1978 = vunpack.c.l.b16 %v1810
    %v1979 = vunpack.c.h.b16 %v1810
    %v1980 = vunpack.c.l.b16 %v1811
    %v1981 = vunpack.c.h.b16 %v1811
    %v1982 = vunpack.c.l.b16 %v1812
    %v1983 = vunpack.c.h.b16 %v1812
    %v1984 = vunpack.c.l.b16 %v1813
    %v1985 = vunpack.c.h.b16 %v1813
    %v1986 = vunpack.c.l.b16 %v1814
    %v1987 = vunpack.c.h.b16 %v1814
    %v1988 = vunpack.c.l.b16 %v1815
    %v1989 = vunpack.c.h.b16 %v1815
    %v1990 = vunpack.c.l.b16 %v1816
    %v1991 = vunpack.c.h.b16 %v1816
    %v1992 = vunpack.c.l.b16 %v1817
    %v1993 = vunpack.c.h.b16 %v1817
    %v1994 = vunpack.c.l.b16 %v1818
    %v1995 = vunpack.c.h.b16 %v1818
    %v1996 = vunpack.c.l.b16 %v1819
    %v1997 = vunpack.c.h.b16 %v1819
    %v1998 = vunpack.c.l.b16 %v1820
    %v1999 = vunpack.c.h.b16 %v1820
    %v2000 = vunpack.c.l.b16 %v1821
    %v2001 = vunpack.c.h.b16 %v1821
    %v2002 = vunpack.c.l.b16 %v1822
    %v2003 = vunpack.c.h.b16 %v1822
    %v2004 = vunpack.c.l.b16 %v1823
    %v2005 = vunpack.c.h.b16 %v1823
    %v2006 = vunpack.c.l.b16 %v1824
    %v2007 = vunpack.c.h.b16 %v1824
    %v2008 = vunpack.c.l.b16 %v1825
    %v2009 = vunpack.c.h.b16 %v1825
    %v2010 = vunpack.c.l.b16 %v1826
    %v2011 = vunpack.c.h.b16 %v1826
    %v2012 = vunpack.c.l.b16 %v1827
    %v2013 = vunpack.c.h.b16 %v1827
    %v2014 = vunpack.c.l.b16 %v1828
    %v2015 = vunpack.c.h.b16 %v1828
    %v2016 = vunpack.c.l.b16 %v1829
    %v2017 = vunpack.c.h.b16 %v1829
    %v2018 = vunpack.c.l.b16 %v1830
    %v2019 = vunpack.c.h.b16 %v1830
    %v2020 = vunpack.c.l.b16 %v1831
    %v2021 = vunpack.c.h.b16 %v1831
    %v2022 = vunpack.c.l.b16 %v1832
    %v2023 = vunpack.c.h.b16 %v1832
    %v2024 = vunpack.c.l.b16 %v1833
    %v2025 = vunpack.c.h.b16 %v1833
    %v2026 = vunpack.c.l.b16 %v1834
    %v2027 = vunpack.c.h.b16 %v1834
    %v2028 = vunpack.c.l.b16 %v1835
    %v2029 = vunpack.c.h.b16 %v1835
    %v2030 = vunpack.c.l.b16 %v1836
    %v2031 = vunpack.c.h.b16 %v1836
    %v2032 = vunpack.c.l.b16 %v1837
    %v2033 = vunpack.c.h.b16 %v1837
    %v2034 = vunpack.c.l.b16 %v1838
    %v2035 = vunpack.c.h.b16 %v1838
    %v2036 = vunpack.c.l.b16 %v1839
    %v2037 = vunpack.c.h.b16 %v1839
    %v2038 = vunpack.c.l.b16 %v1840
    %v2039 = vunpack.c.h.b16 %v1840
    %v2040 = vunpack.c.l.b16 %v1841
    %v2041 = vunpack.c.h.b16 %v1841
    %v2042 = vunpack.c.l.b16 %v1842
    %v2043 = vunpack.c.h.b16 %v1842
    %v2044 = vunpack.c.l.b16 %v1843
    %v2045 = vunpack.c.h.b16 %v1843
    %v2046 = vpack.c.b16 %v1922, %v1918
    %v2047 = vpack.c.b16 %v1923, %v1919
    %v2048 = vpack.c.b16 %v1924, %v1920
    %v2049 = vpack.c.b16 %v1925, %v1921
    %v2050 = vpack.c.b16 %v1930, %v1926
    %v2051 = vpack.c.b16 %v1931, %v1927
    %v2052 = vpack.c.b16 %v1932, %v1928
    %v2053 = vpack.c.b16 %v1933, %v1929
    %v2054 = vpack.c.b16 %v1938, %v1934
    %v2055 = vpack.c.b16 %v1939, %v1935
    %v2056 = vpack.c.b16 %v1940, %v1936
    %v2057 = vpack.c.b16 %v1941, %v1937
    %v2058 = vpack.c.b16 %v1946, %v1942
    %v2059 = vpack.c.b16 %v1947, %v1943
    %v2060 = vpack.c.b16 %v1948, %v1944
    %v2061 = vpack.c.b16 %v1949, %v1945
    %v2062 = vpack.c.b16 %v1954, %v1950
    %v2063 = vpack.c.b16 %v1955, %v1951
    %v2064 = vpack.c.b16 %v1956, %v1952
    %v2065 = vpack.c.b16 %v1957, %v1953
    %v2066 = vpack.c.b16 %v1962, %v1958
    %v2067 = vpack.c.b16 %v1963, %v1959
    %v2068 = vpack.c.b16 %v1964, %v1960
    %v2069 = vpack.c.b16 %v1965, %v1961
    %v2070 = vpack.c.b16 %v1970, %v1966
    %v2071 = vpack.c.b16 %v1971, %v1967
    %v2072 = vpack.c.b16 %v1972, %v1968
    %v2073 = vpack.c.b16 %v1973, %v1969
    %v2074 = vpack.c.b16 %v1978, %v1974
    %v2075 = vpack.c.b16 %v1979, %v1975
    %v2076 = vpack.c.b16 %v1980, %v1976
    %v2077 = vpack.c.b16 %v1981, %v1977
    %v2078 = vpack.c.b16 %v1986, %v1982
    %v2079 = vpack.c.b16 %v1987, %v1983
    %v2080 = vpack.c.b16 %v1988, %v1984
    %v2081 = vpack.c.b16 %v1989, %v1985
    %v2082 = vpack.c.b16 %v1994, %v1990
    %v2083 = vpack.c.b16 %v1995, %v1991
    %v2084 = vpack.c.b16 %v1996, %v1992
    %v2085 = vpack.c.b16 %v1997, %v1993
    %v2086 = vpack.c.b16 %v2002, %v1998
    %v2087 = vpack.c.b16 %v2003, %v1999
    %v2088 = vpack.c.b16 %v2004, %v2000
    %v2089 = vpack.c.b16 %v2005, %v2001
    %v2090 = vpack.c.b16 %v2010, %v2006
    %v2091 = vpack.c.b16 %v2011, %v2007
    %v2092 = vpack.c.b16 %v2012, %v2008
    %v2093 = vpack.c.b16 %v2013, %v2009
    %v2094 = vpack.c.b16 %v2018, %v2014
    %v2095 = vpack.c.b16 %v2019, %v2015
    %v2096 = vpack.c.b16 %v2020, %v2016
    %v2097 = vpack.c.b16 %v2021, %v2017
    %v2098 = vpack.c.b16 %v2026, %v2022
    %v2099 = vpack.c.b16 %v2027, %v2023
    %v2100 = vpack.c.b16 %v2028, %v2024
    %v2101 = vpack.c.b16 %v2029, %v2025
    %v2102 = vpack.c.b16 %v2034, %v2030
    %v2103 = vpack.c.b16 %v2035, %v2031
    %v2104 = vpack.c.b16 %v2036, %v2032
    %v2105 = vpack.c.b16 %v2037, %v2033
    %v2106 = vpack.c.b16 %v2042, %v2038
    %v2107 = vpack.c.b16 %v2043, %v2039
    %v2108 = vpack.c.b16 %v2044, %v2040
    %v2109 = vpack.c.b16 %v2045, %v2041
    %2174 = vmatpush.bf16.msra.mxu0 %v2074
    %2175 = vmatpush.bf16.msra.mxu0 %v2070
    %2176 = vmatpush.bf16.msra.mxu0 %v2066
    %2177 = vmatpush.bf16.msra.mxu0 %v2062
    %2178 = vmatpush.bf16.msra.mxu0 %v2058
    %2179 = vmatpush.bf16.msra.mxu0 %v2054
    %2180 = vmatpush.bf16.msra.mxu0 %v2050
    %2181 = vmatpush.bf16.msra.mxu0 %v2046
    %2182 = vmatmul.bf16.gmra.mxu0 %v1772
    %v2183 = vpop.f32.mrf.mxu0
    %v2184 = vadd.f32 %v1846, %v2183
    %v2185 = vpop.f32.mrf.mxu0
    %v2186 = vadd.f32 %v1846, %v2185
    %2187 = vmatmul.bf16.gmra.mxu0 %v1774
    %v2188 = vpop.f32.mrf.mxu0
    %v2189 = vadd.f32 %v1846, %v2188
    %v2190 = vpop.f32.mrf.mxu0
    %v2191 = vadd.f32 %v1846, %v2190
    %2192 = vmatmul.bf16.gmra.mxu0 %v1776
    %v2193 = vpop.f32.mrf.mxu0
    %v2194 = vadd.f32 %v1846, %v2193
    %v2195 = vpop.f32.mrf.mxu0
    %v2196 = vadd.f32 %v1846, %v2195
    %2197 = vmatmul.bf16.gmra.mxu0 %v1778
    %v2198 = vpop.f32.mrf.mxu0
    %v2199 = vadd.f32 %v1846, %v2198
    %v2200 = vpop.f32.mrf.mxu0
    %v2201 = vadd.f32 %v1846, %v2200
    %2202 = vdwg.mxu0
    %2203 = vmatpush.bf16.msra.mxu0 %v2106
    %2204 = vmatpush.bf16.msra.mxu0 %v2102
    %2205 = vmatpush.bf16.msra.mxu0 %v2098
    %2206 = vmatpush.bf16.msra.mxu0 %v2094
    %2207 = vmatpush.bf16.msra.mxu0 %v2090
    %2208 = vmatpush.bf16.msra.mxu0 %v2086
    %2209 = vmatpush.bf16.msra.mxu0 %v2082
    %2210 = vmatpush.bf16.msra.mxu0 %v2078
    %2211 = vmatmul.bf16.gmra.mxu0 %v1773
    %v2212 = vpop.f32.mrf.mxu0
    %v2213 = vadd.f32 %v2184, %v2212
    %v2214 = vpop.f32.mrf.mxu0
    %v2215 = vadd.f32 %v2186, %v2214
    %2216 = vmatmul.bf16.gmra.mxu0 %v1775
    %v2217 = vpop.f32.mrf.mxu0
    %v2218 = vadd.f32 %v2189, %v2217
    %v2219 = vpop.f32.mrf.mxu0
    %v2220 = vadd.f32 %v2191, %v2219
    %2221 = vmatmul.bf16.gmra.mxu0 %v1777
    %v2222 = vpop.f32.mrf.mxu0
    %v2223 = vadd.f32 %v2194, %v2222
    %v2224 = vpop.f32.mrf.mxu0
    %v2225 = vadd.f32 %v2196, %v2224
    %2226 = vmatmul.bf16.gmra.mxu0 %v1779
    %v2227 = vpop.f32.mrf.mxu0
    %v2228 = vadd.f32 %v2199, %v2227
    %v2229 = vpop.f32.mrf.mxu0
    %v2230 = vadd.f32 %v2201, %v2229
    %2231 = vdwg.mxu0
    %2232 = vmatpush.bf16.msra.mxu0 %v2075
    %2233 = vmatpush.bf16.msra.mxu0 %v2071
    %2234 = vmatpush.bf16.msra.mxu0 %v2067
    %2235 = vmatpush.bf16.msra.mxu0 %v2063
    %2236 = vmatpush.bf16.msra.mxu0 %v2059
    %2237 = vmatpush.bf16.msra.mxu0 %v2055
    %2238 = vmatpush.bf16.msra.mxu0 %v2051
    %2239 = vmatpush.bf16.msra.mxu0 %v2047
    %2240 = vmatmul.bf16.gmra.mxu0 %v1772
    %v2241 = vpop.f32.mrf.mxu0
    %v2242 = vadd.f32 %v1847, %v2241
    %v2243 = vpop.f32.mrf.mxu0
    %v2244 = vadd.f32 %v1847, %v2243
    %2245 = vmatmul.bf16.gmra.mxu0 %v1774
    %v2246 = vpop.f32.mrf.mxu0
    %v2247 = vadd.f32 %v1847, %v2246
    %v2248 = vpop.f32.mrf.mxu0
    %v2249 = vadd.f32 %v1847, %v2248
    %2250 = vmatmul.bf16.gmra.mxu0 %v1776
    %v2251 = vpop.f32.mrf.mxu0
    %v2252 = vadd.f32 %v1847, %v2251
    %v2253 = vpop.f32.mrf.mxu0
    %v2254 = vadd.f32 %v1847, %v2253
    %2255 = vmatmul.bf16.gmra.mxu0 %v1778
    %v2256 = vpop.f32.mrf.mxu0
    %v2257 = vadd.f32 %v1847, %v2256
    %v2258 = vpop.f32.mrf.mxu0
    %v2259 = vadd.f32 %v1847, %v2258
    %2260 = vdwg.mxu0
    %2261 = vmatpush.bf16.msra.mxu0 %v2107
    %2262 = vmatpush.bf16.msra.mxu0 %v2103
    %2263 = vmatpush.bf16.msra.mxu0 %v2099
    %2264 = vmatpush.bf16.msra.mxu0 %v2095
    %2265 = vmatpush.bf16.msra.mxu0 %v2091
    %2266 = vmatpush.bf16.msra.mxu0 %v2087
    %2267 = vmatpush.bf16.msra.mxu0 %v2083
    %2268 = vmatpush.bf16.msra.mxu0 %v2079
    %2269 = vmatmul.bf16.gmra.mxu0 %v1773
    %v2270 = vpop.f32.mrf.mxu0
    %v2271 = vadd.f32 %v2242, %v2270
    %v2272 = vpop.f32.mrf.mxu0
    %v2273 = vadd.f32 %v2244, %v2272
    %2274 = vmatmul.bf16.gmra.mxu0 %v1775
    %v2275 = vpop.f32.mrf.mxu0
    %v2276 = vadd.f32 %v2247, %v2275
    %v2277 = vpop.f32.mrf.mxu0
    %v2278 = vadd.f32 %v2249, %v2277
    %2279 = vmatmul.bf16.gmra.mxu0 %v1777
    %v2280 = vpop.f32.mrf.mxu0
    %v2281 = vadd.f32 %v2252, %v2280
    %v2282 = vpop.f32.mrf.mxu0
    %v2283 = vadd.f32 %v2254, %v2282
    %2284 = vmatmul.bf16.gmra.mxu0 %v1779
    %v2285 = vpop.f32.mrf.mxu0
    %v2286 = vadd.f32 %v2257, %v2285
    %v2287 = vpop.f32.mrf.mxu0
    %v2288 = vadd.f32 %v2259, %v2287
    %2289 = vdwg.mxu0
    %2290 = vmatpush.bf16.msra.mxu0 %v2076
    %2291 = vmatpush.bf16.msra.mxu0 %v2072
    %2292 = vmatpush.bf16.msra.mxu0 %v2068
    %2293 = vmatpush.bf16.msra.mxu0 %v2064
    %2294 = vmatpush.bf16.msra.mxu0 %v2060
    %2295 = vmatpush.bf16.msra.mxu0 %v2056
    %2296 = vmatpush.bf16.msra.mxu0 %v2052
    %2297 = vmatpush.bf16.msra.mxu0 %v2048
    %2298 = vmatmul.bf16.gmra.mxu0 %v1772
    %v2299 = vpop.f32.mrf.mxu0
    %v2300 = vadd.f32 %v1848, %v2299
    %v2301 = vpop.f32.mrf.mxu0
    %v2302 = vadd.f32 %v1848, %v2301
    %2303 = vmatmul.bf16.gmra.mxu0 %v1774
    %v2304 = vpop.f32.mrf.mxu0
    %v2305 = vadd.f32 %v1848, %v2304
    %v2306 = vpop.f32.mrf.mxu0
    %v2307 = vadd.f32 %v1848, %v2306
    %2308 = vmatmul.bf16.gmra.mxu0 %v1776
    %v2309 = vpop.f32.mrf.mxu0
    %v2310 = vadd.f32 %v1848, %v2309
    %v2311 = vpop.f32.mrf.mxu0
    %v2312 = vadd.f32 %v1848, %v2311
    %2313 = vmatmul.bf16.gmra.mxu0 %v1778
    %v2314 = vpop.f32.mrf.mxu0
    %v2315 = vadd.f32 %v1848, %v2314
    %v2316 = vpop.f32.mrf.mxu0
    %v2317 = vadd.f32 %v1848, %v2316
    %2318 = vdwg.mxu0
    %2319 = vmatpush.bf16.msra.mxu0 %v2108
    %2320 = vmatpush.bf16.msra.mxu0 %v2104
    %2321 = vmatpush.bf16.msra.mxu0 %v2100
    %2322 = vmatpush.bf16.msra.mxu0 %v2096
    %2323 = vmatpush.bf16.msra.mxu0 %v2092
    %2324 = vmatpush.bf16.msra.mxu0 %v2088
    %2325 = vmatpush.bf16.msra.mxu0 %v2084
    %2326 = vmatpush.bf16.msra.mxu0 %v2080
    %2327 = vmatmul.bf16.gmra.mxu0 %v1773
    %v2328 = vpop.f32.mrf.mxu0
    %v2329 = vadd.f32 %v2300, %v2328
    %v2330 = vpop.f32.mrf.mxu0
    %v2331 = vadd.f32 %v2302, %v2330
    %2332 = vmatmul.bf16.gmra.mxu0 %v1775
    %v2333 = vpop.f32.mrf.mxu0
    %v2334 = vadd.f32 %v2305, %v2333
    %v2335 = vpop.f32.mrf.mxu0
    %v2336 = vadd.f32 %v2307, %v2335
    %2337 = vmatmul.bf16.gmra.mxu0 %v1777
    %v2338 = vpop.f32.mrf.mxu0
    %v2339 = vadd.f32 %v2310, %v2338
    %v2340 = vpop.f32.mrf.mxu0
    %v2341 = vadd.f32 %v2312, %v2340
    %2342 = vmatmul.bf16.gmra.mxu0 %v1779
    %v2343 = vpop.f32.mrf.mxu0
    %v2344 = vadd.f32 %v2315, %v2343
    %v2345 = vpop.f32.mrf.mxu0
    %v2346 = vadd.f32 %v2317, %v2345
    %2347 = vdwg.mxu0
    %2348 = vmatpush.bf16.msra.mxu0 %v2077
    %2349 = vmatpush.bf16.msra.mxu0 %v2073
    %2350 = vmatpush.bf16.msra.mxu0 %v2069
    %2351 = vmatpush.bf16.msra.mxu0 %v2065
    %2352 = vmatpush.bf16.msra.mxu0 %v2061
    %2353 = vmatpush.bf16.msra.mxu0 %v2057
    %2354 = vmatpush.bf16.msra.mxu0 %v2053
    %2355 = vmatpush.bf16.msra.mxu0 %v2049
    %2356 = vmatmul.bf16.gmra.mxu0 %v1772
    %v2357 = vpop.f32.mrf.mxu0
    %v2358 = vadd.f32 %v1849, %v2357
    %v2359 = vpop.f32.mrf.mxu0
    %v2360 = vadd.f32 %v1849, %v2359
    %2361 = vmatmul.bf16.gmra.mxu0 %v1774
    %v2362 = vpop.f32.mrf.mxu0
    %v2363 = vadd.f32 %v1849, %v2362
    %v2364 = vpop.f32.mrf.mxu0
    %v2365 = vadd.f32 %v1849, %v2364
    %2366 = vmatmul.bf16.gmra.mxu0 %v1776
    %v2367 = vpop.f32.mrf.mxu0
    %v2368 = vadd.f32 %v1849, %v2367
    %v2369 = vpop.f32.mrf.mxu0
    %v2370 = vadd.f32 %v1849, %v2369
    %2371 = vmatmul.bf16.gmra.mxu0 %v1778
    %v2372 = vpop.f32.mrf.mxu0
    %v2373 = vadd.f32 %v1849, %v2372
    %v2374 = vpop.f32.mrf.mxu0
    %v2375 = vadd.f32 %v1849, %v2374
    %2376 = vdwg.mxu0
    %2377 = vmatpush.bf16.msra.mxu0 %v2109
    %2378 = vmatpush.bf16.msra.mxu0 %v2105
    %2379 = vmatpush.bf16.msra.mxu0 %v2101
    %2380 = vmatpush.bf16.msra.mxu0 %v2097
    %2381 = vmatpush.bf16.msra.mxu0 %v2093
    %2382 = vmatpush.bf16.msra.mxu0 %v2089
    %2383 = vmatpush.bf16.msra.mxu0 %v2085
    %2384 = vmatpush.bf16.msra.mxu0 %v2081
    %2385 = vmatmul.bf16.gmra.mxu0 %v1773
    %v2386 = vpop.f32.mrf.mxu0
    %v2387 = vadd.f32 %v2358, %v2386
    %v2388 = vpop.f32.mrf.mxu0
    %v2389 = vadd.f32 %v2360, %v2388
    %2390 = vmatmul.bf16.gmra.mxu0 %v1775
    %v2391 = vpop.f32.mrf.mxu0
    %v2392 = vadd.f32 %v2363, %v2391
    %v2393 = vpop.f32.mrf.mxu0
    %v2394 = vadd.f32 %v2365, %v2393
    %2395 = vmatmul.bf16.gmra.mxu0 %v1777
    %v2396 = vpop.f32.mrf.mxu0
    %v2397 = vadd.f32 %v2368, %v2396
    %v2398 = vpop.f32.mrf.mxu0
    %v2399 = vadd.f32 %v2370, %v2398
    %2400 = vmatmul.bf16.gmra.mxu0 %v1779
    %v2401 = vpop.f32.mrf.mxu0
    %v2402 = vadd.f32 %v2373, %v2401
    %v2403 = vpop.f32.mrf.mxu0
    %v2404 = vadd.f32 %v2375, %v2403
    %2405 = vdwg.mxu0
    %v2406 = vmax.f32 %v2213, 0.0
    %v2407 = vmax.f32 %v2271, 0.0
    %v2408 = vmax.f32 %v2329, 0.0
    %v2409 = vmax.f32 %v2387, 0.0
    %v2410 = vmax.f32 %v2215, 0.0
    %v2411 = vmax.f32 %v2273, 0.0
    %v2412 = vmax.f32 %v2331, 0.0
    %v2413 = vmax.f32 %v2389, 0.0
    %v2414 = vmax.f32 %v2218, 0.0
    %v2415 = vmax.f32 %v2276, 0.0
    %v2416 = vmax.f32 %v2334, 0.0
    %v2417 = vmax.f32 %v2392, 0.0
    %v2418 = vmax.f32 %v2220, 0.0
    %v2419 = vmax.f32 %v2278, 0.0
    %v2420 = vmax.f32 %v2336, 0.0
    %v2421 = vmax.f32 %v2394, 0.0
    %v2422 = vmax.f32 %v2223, 0.0
    %v2423 = vmax.f32 %v2281, 0.0
    %v2424 = vmax.f32 %v2339, 0.0
    %v2425 = vmax.f32 %v2397, 0.0
    %v2426 = vmax.f32 %v2225, 0.0
    %v2427 = vmax.f32 %v2283, 0.0
    %v2428 = vmax.f32 %v2341, 0.0
    %v2429 = vmax.f32 %v2399, 0.0
    %v2430 = vmax.f32 %v2228, 0.0
    %v2431 = vmax.f32 %v2286, 0.0
    %v2432 = vmax.f32 %v2344, 0.0
    %v2433 = vmax.f32 %v2402, 0.0
    %v2434 = vmax.f32 %v2230, 0.0
    %v2435 = vmax.f32 %v2288, 0.0
    %v2436 = vmax.f32 %v2346, 0.0
    %v2437 = vmax.f32 %v2404, 0.0
    %v2438 = vpack.c.bf16 %v2410, %v2406
    %v2439 = vpack.c.bf16 %v2411, %v2407
    %v2440 = vpack.c.bf16 %v2412, %v2408
    %v2441 = vpack.c.bf16 %v2413, %v2409
    %v2442 = vpack.c.bf16 %v2418, %v2414
    %v2443 = vpack.c.bf16 %v2419, %v2415
    %v2444 = vpack.c.bf16 %v2420, %v2416
    %v2445 = vpack.c.bf16 %v2421, %v2417
    %v2446 = vpack.c.bf16 %v2426, %v2422
    %v2447 = vpack.c.bf16 %v2427, %v2423
    %v2448 = vpack.c.bf16 %v2428, %v2424
    %v2449 = vpack.c.bf16 %v2429, %v2425
    %v2450 = vpack.c.bf16 %v2434, %v2430
    %v2451 = vpack.c.bf16 %v2435, %v2431
    %v2452 = vpack.c.bf16 %v2436, %v2432
    %v2453 = vpack.c.bf16 %v2437, %v2433
    %v2454 = vld [vmem:[#allocation13] sm:$0xf]
    %v2455 = vld [vmem:[#allocation13 + $0x4] sm:$0xf]
    %v2456 = vld [vmem:[#allocation13 + $0x8] sm:$0xf]
    %v2457 = vld [vmem:[#allocation13 + $0xc] sm:$0xf]
    %v2458 = vld [vmem:[#allocation13 + $0x10] sm:$0xf]
    %v2459 = vld [vmem:[#allocation13 + $0x14] sm:$0xf]
    %v2460 = vld [vmem:[#allocation13 + $0x18] sm:$0xf]
    %v2461 = vld [vmem:[#allocation13 + $0x1c] sm:$0xf]
    %v2462 = vld [vmem:[#allocation13 + $0x20] sm:$0xf]
    %v2463 = vld [vmem:[#allocation13 + $0x24] sm:$0xf]
    %v2464 = vld [vmem:[#allocation13 + $0x28] sm:$0xf]
    %v2465 = vld [vmem:[#allocation13 + $0x2c] sm:$0xf]
    %v2466 = vld [vmem:[#allocation13 + $0x30] sm:$0xf]
    %v2467 = vld [vmem:[#allocation13 + $0x34] sm:$0xf]
    %v2468 = vld [vmem:[#allocation13 + $0x38] sm:$0xf]
    %v2469 = vld [vmem:[#allocation13 + $0x3c] sm:$0xf]
    %v2470 = vld [vmem:[#allocation13 + $0x40] sm:$0xf]
    %v2471 = vld [vmem:[#allocation13 + $0x44] sm:$0xf]
    %v2472 = vld [vmem:[#allocation13 + $0x48] sm:$0xf]
    %v2473 = vld [vmem:[#allocation13 + $0x4c] sm:$0xf]
    %v2474 = vld [vmem:[#allocation13 + $0x50] sm:$0xf]
    %v2475 = vld [vmem:[#allocation13 + $0x54] sm:$0xf]
    %v2476 = vld [vmem:[#allocation13 + $0x58] sm:$0xf]
    %v2477 = vld [vmem:[#allocation13 + $0x5c] sm:$0xf]
    %v2478 = vld [vmem:[#allocation13 + $0x60] sm:$0xf]
    %v2479 = vld [vmem:[#allocation13 + $0x64] sm:$0xf]
    %v2480 = vld [vmem:[#allocation13 + $0x68] sm:$0xf]
    %v2481 = vld [vmem:[#allocation13 + $0x6c] sm:$0xf]
    %v2482 = vld [vmem:[#allocation13 + $0x70] sm:$0xf]
    %v2483 = vld [vmem:[#allocation13 + $0x74] sm:$0xf]
    %v2484 = vld [vmem:[#allocation13 + $0x78] sm:$0xf]
    %v2485 = vld [vmem:[#allocation13 + $0x7c] sm:$0xf]
    %v2486 = vld [vmem:[#allocation13 + $0x80] sm:$0xf]
    %v2487 = vld [vmem:[#allocation13 + $0x84] sm:$0xf]
    %v2488 = vld [vmem:[#allocation13 + $0x88] sm:$0xf]
    %v2489 = vld [vmem:[#allocation13 + $0x8c] sm:$0xf]
    %v2490 = vld [vmem:[#allocation13 + $0x90] sm:$0xf]
    %v2491 = vld [vmem:[#allocation13 + $0x94] sm:$0xf]
    %v2492 = vld [vmem:[#allocation13 + $0x98] sm:$0xf]
    %v2493 = vld [vmem:[#allocation13 + $0x9c] sm:$0xf]
    %v2494 = vld [vmem:[#allocation13 + $0xa0] sm:$0xf]
    %v2495 = vld [vmem:[#allocation13 + $0xa4] sm:$0xf]
    %v2496 = vld [vmem:[#allocation13 + $0xa8] sm:$0xf]
    %v2497 = vld [vmem:[#allocation13 + $0xac] sm:$0xf]
    %v2498 = vld [vmem:[#allocation13 + $0xb0] sm:$0xf]
    %v2499 = vld [vmem:[#allocation13 + $0xb4] sm:$0xf]
    %v2500 = vld [vmem:[#allocation13 + $0xb8] sm:$0xf]
    %v2501 = vld [vmem:[#allocation13 + $0xbc] sm:$0xf]
    %v2502 = vld [vmem:[#allocation13 + $0xc0] sm:$0xf]
    %v2503 = vld [vmem:[#allocation13 + $0xc4] sm:$0xf]
    %v2504 = vld [vmem:[#allocation13 + $0xc8] sm:$0xf]
    %v2505 = vld [vmem:[#allocation13 + $0xcc] sm:$0xf]
    %v2506 = vld [vmem:[#allocation13 + $0xd0] sm:$0xf]
    %v2507 = vld [vmem:[#allocation13 + $0xd4] sm:$0xf]
    %v2508 = vld [vmem:[#allocation13 + $0xd8] sm:$0xf]
    %v2509 = vld [vmem:[#allocation13 + $0xdc] sm:$0xf]
    %v2510 = vld [vmem:[#allocation13 + $0xe0] sm:$0xf]
    %v2511 = vld [vmem:[#allocation13 + $0xe4] sm:$0xf]
    %v2512 = vld [vmem:[#allocation13 + $0xe8] sm:$0xf]
    %v2513 = vld [vmem:[#allocation13 + $0xec] sm:$0xf]
    %v2514 = vld [vmem:[#allocation13 + $0xf0] sm:$0xf]
    %v2515 = vld [vmem:[#allocation13 + $0xf4] sm:$0xf]
    %v2516 = vld [vmem:[#allocation13 + $0xf8] sm:$0xf]
    %v2517 = vld [vmem:[#allocation13 + $0xfc] sm:$0xf]
    %v2518 = vld [vmem:[%s8] sm:$0x1]
    %v2520 = vperm.slane %v2518, 0
    %v2586 = vunpack.c.l.b16 %v2454
    %v2587 = vunpack.c.l.b16 %v2455
    %v2588 = vunpack.c.l.b16 %v2456
    %v2589 = vunpack.c.l.b16 %v2457
    %v2590 = vunpack.c.l.b16 %v2458
    %v2591 = vunpack.c.l.b16 %v2459
    %v2592 = vunpack.c.l.b16 %v2460
    %v2593 = vunpack.c.l.b16 %v2461
    %v2594 = vunpack.c.l.b16 %v2462
    %v2595 = vunpack.c.l.b16 %v2463
    %v2596 = vunpack.c.l.b16 %v2464
    %v2597 = vunpack.c.l.b16 %v2465
    %v2598 = vunpack.c.l.b16 %v2466
    %v2599 = vunpack.c.l.b16 %v2467
    %v2600 = vunpack.c.l.b16 %v2468
    %v2601 = vunpack.c.l.b16 %v2469
    %v2602 = vunpack.c.l.b16 %v2470
    %v2603 = vunpack.c.l.b16 %v2471
    %v2604 = vunpack.c.l.b16 %v2472
    %v2605 = vunpack.c.l.b16 %v2473
    %v2606 = vunpack.c.l.b16 %v2474
    %v2607 = vunpack.c.l.b16 %v2475
    %v2608 = vunpack.c.l.b16 %v2476
    %v2609 = vunpack.c.l.b16 %v2477
    %v2610 = vunpack.c.l.b16 %v2478
    %v2611 = vunpack.c.l.b16 %v2479
    %v2612 = vunpack.c.l.b16 %v2480
    %v2613 = vunpack.c.l.b16 %v2481
    %v2614 = vunpack.c.l.b16 %v2482
    %v2615 = vunpack.c.l.b16 %v2483
    %v2616 = vunpack.c.l.b16 %v2484
    %v2617 = vunpack.c.l.b16 %v2485
    %v2618 = vunpack.c.l.b16 %v2486
    %v2619 = vunpack.c.l.b16 %v2487
    %v2620 = vunpack.c.l.b16 %v2488
    %v2621 = vunpack.c.l.b16 %v2489
    %v2622 = vunpack.c.l.b16 %v2490
    %v2623 = vunpack.c.l.b16 %v2491
    %v2624 = vunpack.c.l.b16 %v2492
    %v2625 = vunpack.c.l.b16 %v2493
    %v2626 = vunpack.c.l.b16 %v2494
    %v2627 = vunpack.c.l.b16 %v2495
    %v2628 = vunpack.c.l.b16 %v2496
    %v2629 = vunpack.c.l.b16 %v2497
    %v2630 = vunpack.c.l.b16 %v2498
    %v2631 = vunpack.c.l.b16 %v2499
    %v2632 = vunpack.c.l.b16 %v2500
    %v2633 = vunpack.c.l.b16 %v2501
    %v2634 = vunpack.c.l.b16 %v2502
    %v2635 = vunpack.c.l.b16 %v2503
    %v2636 = vunpack.c.l.b16 %v2504
    %v2637 = vunpack.c.l.b16 %v2505
    %v2638 = vunpack.c.l.b16 %v2506
    %v2639 = vunpack.c.l.b16 %v2507
    %v2640 = vunpack.c.l.b16 %v2508
    %v2641 = vunpack.c.l.b16 %v2509
    %v2642 = vunpack.c.l.b16 %v2510
    %v2643 = vunpack.c.l.b16 %v2511
    %v2644 = vunpack.c.l.b16 %v2512
    %v2645 = vunpack.c.l.b16 %v2513
    %v2646 = vunpack.c.l.b16 %v2514
    %v2647 = vunpack.c.l.b16 %v2515
    %v2648 = vunpack.c.l.b16 %v2516
    %v2649 = vunpack.c.l.b16 %v2517
    %v2650 = vpack.c.b16 %v2587, %v2586
    %v2651 = vpack.c.b16 %v2589, %v2588
    %v2652 = vpack.c.b16 %v2591, %v2590
    %v2653 = vpack.c.b16 %v2593, %v2592
    %v2654 = vpack.c.b16 %v2595, %v2594
    %v2655 = vpack.c.b16 %v2597, %v2596
    %v2656 = vpack.c.b16 %v2599, %v2598
    %v2657 = vpack.c.b16 %v2601, %v2600
    %v2658 = vpack.c.b16 %v2603, %v2602
    %v2659 = vpack.c.b16 %v2605, %v2604
    %v2660 = vpack.c.b16 %v2607, %v2606
    %v2661 = vpack.c.b16 %v2609, %v2608
    %v2662 = vpack.c.b16 %v2611, %v2610
    %v2663 = vpack.c.b16 %v2613, %v2612
    %v2664 = vpack.c.b16 %v2615, %v2614
    %v2665 = vpack.c.b16 %v2617, %v2616
    %v2666 = vpack.c.b16 %v2619, %v2618
    %v2667 = vpack.c.b16 %v2621, %v2620
    %v2668 = vpack.c.b16 %v2623, %v2622
    %v2669 = vpack.c.b16 %v2625, %v2624
    %v2670 = vpack.c.b16 %v2627, %v2626
    %v2671 = vpack.c.b16 %v2629, %v2628
    %v2672 = vpack.c.b16 %v2631, %v2630
    %v2673 = vpack.c.b16 %v2633, %v2632
    %v2674 = vpack.c.b16 %v2635, %v2634
    %v2675 = vpack.c.b16 %v2637, %v2636
    %v2676 = vpack.c.b16 %v2639, %v2638
    %v2677 = vpack.c.b16 %v2641, %v2640
    %v2678 = vpack.c.b16 %v2643, %v2642
    %v2679 = vpack.c.b16 %v2645, %v2644
    %v2680 = vpack.c.b16 %v2647, %v2646
    %v2681 = vpack.c.b16 %v2649, %v2648
    %2714 = vmatpush.bf16.msra.mxu0 %v2657
    %2715 = vmatpush.bf16.msra.mxu0 %v2656
    %2716 = vmatpush.bf16.msra.mxu0 %v2655
    %2717 = vmatpush.bf16.msra.mxu0 %v2654
    %2718 = vmatpush.bf16.msra.mxu0 %v2653
    %2719 = vmatpush.bf16.msra.mxu0 %v2652
    %2720 = vmatpush.bf16.msra.mxu0 %v2651
    %2721 = vmatpush.bf16.msra.mxu0 %v2650
    %2722 = vmatmul.bf16.gmra.mxu0 %v2438
    %v2723 = vpop.f32.mrf.mxu0
    %v2724 = vadd.f32 %v2520, %v2723
    %v2725 = vpop.f32.mrf.mxu0
    %v2726 = vadd.f32 %v2520, %v2725
    %2727 = vmatmul.bf16.gmra.mxu0 %v2442
    %v2728 = vpop.f32.mrf.mxu0
    %v2729 = vadd.f32 %v2520, %v2728
    %v2730 = vpop.f32.mrf.mxu0
    %v2731 = vadd.f32 %v2520, %v2730
    %2732 = vmatmul.bf16.gmra.mxu0 %v2446
    %v2733 = vpop.f32.mrf.mxu0
    %v2734 = vadd.f32 %v2520, %v2733
    %v2735 = vpop.f32.mrf.mxu0
    %v2736 = vadd.f32 %v2520, %v2735
    %2737 = vmatmul.bf16.gmra.mxu0 %v2450
    %v2738 = vpop.f32.mrf.mxu0
    %v2739 = vadd.f32 %v2520, %v2738
    %v2740 = vpop.f32.mrf.mxu0
    %v2741 = vadd.f32 %v2520, %v2740
    %2742 = vdwg.mxu0
    %2743 = vmatpush.bf16.msra.mxu0 %v2665
    %2744 = vmatpush.bf16.msra.mxu0 %v2664
    %2745 = vmatpush.bf16.msra.mxu0 %v2663
    %2746 = vmatpush.bf16.msra.mxu0 %v2662
    %2747 = vmatpush.bf16.msra.mxu0 %v2661
    %2748 = vmatpush.bf16.msra.mxu0 %v2660
    %2749 = vmatpush.bf16.msra.mxu0 %v2659
    %2750 = vmatpush.bf16.msra.mxu0 %v2658
    %2751 = vmatmul.bf16.gmra.mxu0 %v2439
    %v2752 = vpop.f32.mrf.mxu0
    %v2753 = vadd.f32 %v2724, %v2752
    %v2754 = vpop.f32.mrf.mxu0
    %v2755 = vadd.f32 %v2726, %v2754
    %2756 = vmatmul.bf16.gmra.mxu0 %v2443
    %v2757 = vpop.f32.mrf.mxu0
    %v2758 = vadd.f32 %v2729, %v2757
    %v2759 = vpop.f32.mrf.mxu0
    %v2760 = vadd.f32 %v2731, %v2759
    %2761 = vmatmul.bf16.gmra.mxu0 %v2447
    %v2762 = vpop.f32.mrf.mxu0
    %v2763 = vadd.f32 %v2734, %v2762
    %v2764 = vpop.f32.mrf.mxu0
    %v2765 = vadd.f32 %v2736, %v2764
    %2766 = vmatmul.bf16.gmra.mxu0 %v2451
    %v2767 = vpop.f32.mrf.mxu0
    %v2768 = vadd.f32 %v2739, %v2767
    %v2769 = vpop.f32.mrf.mxu0
    %v2770 = vadd.f32 %v2741, %v2769
    %2771 = vdwg.mxu0
    %2772 = vmatpush.bf16.msra.mxu0 %v2673
    %2773 = vmatpush.bf16.msra.mxu0 %v2672
    %2774 = vmatpush.bf16.msra.mxu0 %v2671
    %2775 = vmatpush.bf16.msra.mxu0 %v2670
    %2776 = vmatpush.bf16.msra.mxu0 %v2669
    %2777 = vmatpush.bf16.msra.mxu0 %v2668
    %2778 = vmatpush.bf16.msra.mxu0 %v2667
    %2779 = vmatpush.bf16.msra.mxu0 %v2666
    %2780 = vmatmul.bf16.gmra.mxu0 %v2440
    %v2781 = vpop.f32.mrf.mxu0
    %v2782 = vadd.f32 %v2753, %v2781
    %v2783 = vpop.f32.mrf.mxu0
    %v2784 = vadd.f32 %v2755, %v2783
    %2785 = vmatmul.bf16.gmra.mxu0 %v2444
    %v2786 = vpop.f32.mrf.mxu0
    %v2787 = vadd.f32 %v2758, %v2786
    %v2788 = vpop.f32.mrf.mxu0
    %v2789 = vadd.f32 %v2760, %v2788
    %2790 = vmatmul.bf16.gmra.mxu0 %v2448
    %v2791 = vpop.f32.mrf.mxu0
    %v2792 = vadd.f32 %v2763, %v2791
    %v2793 = vpop.f32.mrf.mxu0
    %v2794 = vadd.f32 %v2765, %v2793
    %2795 = vmatmul.bf16.gmra.mxu0 %v2452
    %v2796 = vpop.f32.mrf.mxu0
    %v2797 = vadd.f32 %v2768, %v2796
    %v2798 = vpop.f32.mrf.mxu0
    %v2799 = vadd.f32 %v2770, %v2798
    %2800 = vdwg.mxu0
    %2801 = vmatpush.bf16.msra.mxu0 %v2681
    %2802 = vmatpush.bf16.msra.mxu0 %v2680
    %2803 = vmatpush.bf16.msra.mxu0 %v2679
    %2804 = vmatpush.bf16.msra.mxu0 %v2678
    %2805 = vmatpush.bf16.msra.mxu0 %v2677
    %2806 = vmatpush.bf16.msra.mxu0 %v2676
    %2807 = vmatpush.bf16.msra.mxu0 %v2675
    %2808 = vmatpush.bf16.msra.mxu0 %v2674
    %2809 = vmatmul.bf16.gmra.mxu0 %v2441
    %v2810 = vpop.f32.mrf.mxu0
    %v2811 = vadd.f32 %v2782, %v2810
    %v2812 = vpop.f32.mrf.mxu0
    %v2813 = vadd.f32 %v2784, %v2812
    %2814 = vmatmul.bf16.gmra.mxu0 %v2445
    %v2815 = vpop.f32.mrf.mxu0
    %v2816 = vadd.f32 %v2787, %v2815
    %v2817 = vpop.f32.mrf.mxu0
    %v2818 = vadd.f32 %v2789, %v2817
    %2819 = vmatmul.bf16.gmra.mxu0 %v2449
    %v2820 = vpop.f32.mrf.mxu0
    %v2821 = vadd.f32 %v2792, %v2820
    %v2822 = vpop.f32.mrf.mxu0
    %v2823 = vadd.f32 %v2794, %v2822
    %2824 = vmatmul.bf16.gmra.mxu0 %v2453
    %v2825 = vpop.f32.mrf.mxu0
    %v2826 = vadd.f32 %v2797, %v2825
    %v2827 = vpop.f32.mrf.mxu0
    %v2828 = vadd.f32 %v2799, %v2827
    %2829 = vdwg.mxu0
    %v2830 = vmax.f32 %v2811, 0.0
    %v2831 = vmax.f32 %v2813, 0.0
    %v2832 = vmax.f32 %v2816, 0.0
    %v2833 = vmax.f32 %v2818, 0.0
    %v2834 = vmax.f32 %v2821, 0.0
    %v2835 = vmax.f32 %v2823, 0.0
    %v2836 = vmax.f32 %v2826, 0.0
    %v2837 = vmax.f32 %v2828, 0.0
    %v2838 = vpack.c.bf16 %v2831, %v2830
    %v2839 = vpack.c.bf16 %v2833, %v2832
    %v2840 = vpack.c.bf16 %v2835, %v2834
    %v2841 = vpack.c.bf16 %v2837, %v2836
    %v2842 = vld [vmem:[#allocation14] sm:$0xf]
    %v2843 = vld [vmem:[#allocation14 + $0x4] sm:$0xf]
    %v2844 = vld [vmem:[#allocation14 + $0x8] sm:$0xf]
    %v2845 = vld [vmem:[#allocation14 + $0xc] sm:$0xf]
    %v2846 = vld [vmem:[#allocation14 + $0x10] sm:$0xf]
    %v2847 = vld [vmem:[#allocation14 + $0x14] sm:$0xf]
    %v2848 = vld [vmem:[#allocation14 + $0x18] sm:$0xf]
    %v2849 = vld [vmem:[#allocation14 + $0x1c] sm:$0xf]
    %v2850 = vld [vmem:[#allocation14 + $0x20] sm:$0xf]
    %v2851 = vld [vmem:[#allocation14 + $0x24] sm:$0xf]
    %v2852 = vld [vmem:[#allocation14 + $0x28] sm:$0xf]
    %v2853 = vld [vmem:[#allocation14 + $0x2c] sm:$0xf]
    %v2854 = vld [vmem:[#allocation14 + $0x30] sm:$0xf]
    %v2855 = vld [vmem:[#allocation14 + $0x34] sm:$0xf]
    %v2856 = vld [vmem:[#allocation14 + $0x38] sm:$0xf]
    %v2857 = vld [vmem:[#allocation14 + $0x3c] sm:$0xf]
    %v2858 = vld [vmem:[%s10] sm:$0x1]
    %v2860 = vperm.slane %v2858, 0
    %v2878 = vunpack.c.l.b16 %v2842
    %v2879 = vunpack.c.l.b16 %v2843
    %v2880 = vunpack.c.l.b16 %v2844
    %v2881 = vunpack.c.l.b16 %v2845
    %v2882 = vunpack.c.l.b16 %v2846
    %v2883 = vunpack.c.l.b16 %v2847
    %v2884 = vunpack.c.l.b16 %v2848
    %v2885 = vunpack.c.l.b16 %v2849
    %v2886 = vunpack.c.l.b16 %v2850
    %v2887 = vunpack.c.l.b16 %v2851
    %v2888 = vunpack.c.l.b16 %v2852
    %v2889 = vunpack.c.l.b16 %v2853
    %v2890 = vunpack.c.l.b16 %v2854
    %v2891 = vunpack.c.l.b16 %v2855
    %v2892 = vunpack.c.l.b16 %v2856
    %v2893 = vunpack.c.l.b16 %v2857
    %v2894 = vpack.c.b16 %v2879, %v2878
    %v2895 = vpack.c.b16 %v2881, %v2880
    %v2896 = vpack.c.b16 %v2883, %v2882
    %v2897 = vpack.c.b16 %v2885, %v2884
    %v2898 = vpack.c.b16 %v2887, %v2886
    %v2899 = vpack.c.b16 %v2889, %v2888
    %v2900 = vpack.c.b16 %v2891, %v2890
    %v2901 = vpack.c.b16 %v2893, %v2892
    %2910 = vmatpush.bf16.msra.mxu0 %v2901
    %2911 = vmatpush.bf16.msra.mxu0 %v2900
    %2912 = vmatpush.bf16.msra.mxu0 %v2899
    %2913 = vmatpush.bf16.msra.mxu0 %v2898
    %2914 = vmatpush.bf16.msra.mxu0 %v2897
    %2915 = vmatpush.bf16.msra.mxu0 %v2896
    %2916 = vmatpush.bf16.msra.mxu0 %v2895
    %2917 = vmatpush.bf16.msra.mxu0 %v2894
    %2918 = vmatmul.bf16.gmra.mxu0 %v2838
    %v2919 = vpop.f32.mrf.mxu0
    %v2920 = vadd.f32 %v2860, %v2919
    %v2921 = vpop.f32.mrf.mxu0
    %v2922 = vadd.f32 %v2860, %v2921
    %2923 = vmatmul.bf16.gmra.mxu0 %v2839
    %v2924 = vpop.f32.mrf.mxu0
    %v2925 = vadd.f32 %v2860, %v2924
    %v2926 = vpop.f32.mrf.mxu0
    %v2927 = vadd.f32 %v2860, %v2926
    %2928 = vmatmul.bf16.gmra.mxu0 %v2840
    %v2929 = vpop.f32.mrf.mxu0
    %v2930 = vadd.f32 %v2860, %v2929
    %v2931 = vpop.f32.mrf.mxu0
    %v2932 = vadd.f32 %v2860, %v2931
    %2933 = vmatmul.bf16.gmra.mxu0 %v2841
    %v2934 = vpop.f32.mrf.mxu0
    %v2935 = vadd.f32 %v2860, %v2934
    %v2936 = vpop.f32.mrf.mxu0
    %v2937 = vadd.f32 %v2860, %v2936
    %2938 = vdwg.mxu0
    %v2939 = vmax.f32 %v2920, 0.0
    %v2940 = vmax.f32 %v2922, 0.0
    %v2941 = vmax.f32 %v2925, 0.0
    %v2942 = vmax.f32 %v2927, 0.0
    %v2943 = vmax.f32 %v2930, 0.0
    %v2944 = vmax.f32 %v2932, 0.0
    %v2945 = vmax.f32 %v2935, 0.0
    %v2946 = vmax.f32 %v2937, 0.0
    %2947 = vst [vmem:[#allocation16] sm:$0xff] %v2939
    %2948 = vst [vmem:[#allocation16 + $0x8] sm:$0xff] %v2940
    %2949 = vst [vmem:[#allocation16 + $0x10] sm:$0xff] %v2941
    %2950 = vst [vmem:[#allocation16 + $0x18] sm:$0xff] %v2942
    %2951 = vst [vmem:[#allocation16 + $0x20] sm:$0xff] %v2943
    %2952 = vst [vmem:[#allocation16 + $0x28] sm:$0xff] %v2944
    %2953 = vst [vmem:[#allocation16 + $0x30] sm:$0xff] %v2945
    %2954 = vst [vmem:[#allocation16 + $0x38] sm:$0xff] %v2946
    // Predicated region
    $region78: #{tpu_custom_call.1} parent=1 // pred_check
      _
    $region79: #{tpu_custom_call.1} parent=1 // pred_check_branch
      %2956 = sbr.rel (0) target = $region81
    $region80: #{tpu_custom_call.1} parent=1 // pred_region
      %2958 = vsyncadd [#allocation4], 0
      %s2959 = sshll.u32 [#allocation16], 4
      %s2960 = int_to_ptr.vmem [resolvable:$true] %s2959
      %s2961 = sshll.u32 %s11, 4
      %s2962 = int_to_ptr.hbm [resolvable:$true] %s2961
      %2967 = dma.vmem_to_hbm [thread:$0]  %s2960, 1024, %s2962, [#allocation4], 128, 128, 8
    $region81: #{tpu_custom_call.1} parent=1 // pred_fallthru
      _
    // Predicated region
    $region82: #{tpu_custom_call.1} parent=1 // pred_check
      _
    $region83: #{tpu_custom_call.1} parent=1 // pred_check_branch
      %2969 = sbr.rel (0) target = $region85
    $region84: #{tpu_custom_call.1} parent=1 // pred_region
      %2971 = dma.done [#allocation4], 1024
    $region85: #{tpu_custom_call.1} parent=1 // pred_fallthru
      _
    %2972 = vsyncpa [#allocation3], 1
    %2973 = vsyncpa [#allocation6], 1
    %2974 = vsyncpa [#allocation9], 1
    %2975 = vsyncpa [#allocation12], 1
    %2976 = vsyncpa [#allocation15], 1
    %2977 = vsyncpa [#allocation4], 1

</llo_original>
